<compile_context>
chip_gen: v5e
topology: v5e:2x2
jax: 0.10.0
libtpu: 0.0.40
codegen_flags: <defaults>
</compile_context>

<pallas_src>
import functools
import math

import jax
import jax.numpy as jnp
from jax import lax
from jax.experimental import pallas as pl
from jax.experimental.pallas import tpu as pltpu

LANE = 128
VMEM = pl.BlockSpec(memory_space=pltpu.MemorySpace.VMEM)
SMEM = pl.BlockSpec(memory_space=pltpu.MemorySpace.SMEM)


def _round_up(x, m):
    return (x + m - 1) // m * m


# ----------------------------------------------------------------------------
# In-kernel top-2 gating (matches torch.topk + softmax over the 2 winners)
# ----------------------------------------------------------------------------
def _top2_combine(logits, num_experts):
    """Dense (N, E) combine weights: top-2 of logits, softmax over the two."""
    col = lax.broadcasted_iota(jnp.int32, logits.shape, 1)
    big_neg = jnp.float32(-1e30)
    max1 = jnp.max(logits, axis=-1, keepdims=True)
    idx1 = jnp.min(jnp.where(logits >= max1, col, num_experts),
                   axis=-1, keepdims=True)
    m1 = col == idx1
    masked = jnp.where(m1, big_neg, logits)
    max2 = jnp.max(masked, axis=-1, keepdims=True)
    idx2 = jnp.min(jnp.where(masked >= max2, col, num_experts),
                   axis=-1, keepdims=True)
    m2 = col == idx2
    e2 = jnp.exp(max2 - max1)            # max1 >= max2 -> numerically safe
    inv = 1.0 / (1.0 + e2)
    return jnp.where(m1, inv, 0.0) + jnp.where(m2, e2 * inv, 0.0)


# ----------------------------------------------------------------------------
# Fused MoRALinear + LayerNorm + residual + CLS pooling + classifier head
# ----------------------------------------------------------------------------
def _mora_cls_kernel(*refs, num_levels, max_steps, hidden, num_experts,
                     out_features, eps):
    (x_ref, w_ref, b_ref, wih_ref, whh_ref, bl_ref,
     wh_ref, bh_ref, sexp_ref) = refs[:9]
    lvl_refs = refs[9:9 + 3 * num_levels]
    (lng_ref, lnb_ref, pool_ref, dw_ref, db_ref,
     ow_ref, ob_ref) = refs[9 + 3 * num_levels:-1]
    out_ref = refs[-1]

    f32, bf16 = jnp.float32, jnp.bfloat16
    H, E = hidden, num_experts

    x = x_ref[...]                                  # (n, IN) bf16
    n = x.shape[0]

    # ---- base F.linear(x, W, b) (output padded to 128 lanes, pads stay 0) --
    base = jnp.dot(x, w_ref[...], preferred_element_type=f32) + b_ref[...]

    # ---- AdaptiveComputationTime: LSTMCell + sigmoid halting ---------------
    # x-projection of the gates is loop-invariant: hoisted out of the steps.
    xg = jnp.dot(x, wih_ref[...], preferred_element_type=f32) + bl_ref[...]
    whh = whh_ref[...]                              # (H, 4H) bf16
    w_halt = wh_ref[...]                            # (1, H) f32
    b_halt = bh_ref[0, 0]                           # scalar from SMEM

    def act_body(_, carry):
        h, c, hp, rem, nupd, h_sum, run = carry
        # Batch-level `break` of the reference, evaluated on the carried hp
        # (identical value to the reference's post-update check).
        run = run * (jnp.min(hp, axis=0, keepdims=True) <= 1.0 - 0.01
                     ).astype(f32)
        gates = xg + jnp.dot(h.astype(bf16), whh, preferred_element_type=f32)
        if H % LANE == 0:
            # Lane-aligned H: only the transcendentals actually used.
            i_f = jax.nn.sigmoid(gates[:, :2 * H])
            i_g, f_g = i_f[:, :H], i_f[:, H:]
            g_g = jnp.tanh(gates[:, 2 * H:3 * H])
            o_g = jax.nn.sigmoid(gates[:, 3 * H:])
        else:
            # H < 128: the 4H block is one vreg wide -> full-width is cheaper.
            sig = jax.nn.sigmoid(gates)
            tnh = jnp.tanh(gates)
            i_g, f_g = sig[:, :H], sig[:, H:2 * H]
            g_g = tnh[:, 2 * H:3 * H]
            o_g = sig[:, 3 * H:]
        c_new = f_g * c + i_g * g_g
        h_new = o_g * jnp.tanh(c_new)
        # Halting head (width-1 output): VPU multiply + lane reduce, no MXU.
        y = jax.nn.sigmoid(jnp.sum(h_new * w_halt, axis=-1, keepdims=True)
                           + b_halt)
        # Frozen-after-break state updates, reference order.
        h = h + run * (h_new - h)
        c = c + run * (c_new - c)
        hp_new = hp + y * (1.0 - hp)
        hp = hp + run * (hp_new - hp)
        rem = rem + run * (1.0 - hp)
        nupd = nupd + run
        h_sum = h_sum + run * h_new
        return (h, c, hp, rem, nupd, h_sum, run)

    zeros_h = jnp.zeros((n, H), f32)
    zeros_1 = jnp.zeros((n, 1), f32)
    carry = (zeros_h, zeros_h, zeros_1, zeros_1, zeros_1, zeros_h,
             jnp.ones((1, 1), f32))
    _, _, _, rem, nupd, h_sum, _ = lax.fori_loop(0, max_steps, act_body,
                                                 carry, unroll=True)
    z = h_sum * (rem / nupd)             # (sum_t h_t) * final_rem / n_updates

    # ---- HierarchicalExperts: stacked SparseMoE with in-kernel top-2 -------
    s_expand = sexp_ref[...]                        # (E, E*H) 0/1, bf16
    for lvl in range(num_levels):                   # static unroll (few levels)
        w1g_ref, b1g_ref, w2b_ref = lvl_refs[3 * lvl:3 * lvl + 3]
        # One dot yields all experts' fc1 pre-activations AND gating logits.
        hg = (jnp.dot(z.astype(bf16), w1g_ref[...],
                      preferred_element_type=f32) + b1g_ref[...])
        hexp = jnp.maximum(hg[:, :E * H], 0.0)      # (n, E*H)
        cw = _top2_combine(hg[:, E * H:], E)        # (n, E)
        cw_exp = jnp.dot(cw.astype(bf16), s_expand,
                         preferred_element_type=f32)
        # fc2 of all experts in one dot; per-expert bias folded into K via cw.
        lhs = jnp.concatenate([hexp * cw_exp, cw], axis=1).astype(bf16)
        z = jnp.dot(lhs, w2b_ref[...], preferred_element_type=f32)

    # ---- LayerNorm over the real out_features (padded lanes are exactly 0) -
    inv_d = 1.0 / out_features
    s1 = jnp.sum(z, axis=-1, keepdims=True)
    s2 = jnp.sum(z * z, axis=-1, keepdims=True)
    mu = s1 * inv_d
    var = jnp.maximum(s2 * inv_d - mu * mu, 0.0)
    z = (z - mu) * lax.rsqrt(var + eps) * lng_ref[...] + lnb_ref[...]

    # ---- MoRALinear residual -------------------------------------------------
    hidden_tok = base + z                           # (n, OUT_pad); pads = 0

    # ---- CLS pooling + classifier head (dropout == identity at eval) --------
    pooled = jnp.dot(pool_ref[...], hidden_tok.astype(bf16),
                     preferred_element_type=f32)    # (B, OUT_pad)
    h1 = jnp.tanh(jnp.dot(pooled.astype(bf16), dw_ref[...],
                          preferred_element_type=f32) + db_ref[...])
    out_ref[...] = (jnp.dot(h1.astype(bf16), ow_ref[...],
                            preferred_element_type=f32) + ob_ref[...])


# ----------------------------------------------------------------------------
# Module forward
# ----------------------------------------------------------------------------
def mora_for_sequence_classification(params, input_ids, attention_mask, cfg):
    del attention_mask  # TODO(synk): backbone attention not modeled (stub base)
    batch, seq = input_ids.shape
    # TODO(synk): at production vocab/feature sizes, move this gather into the
    #   kernel's DMA pipeline (scalar-prefetched input_ids + row-gather DMA).
    tokens = params["embedding"][input_ids].reshape(batch * seq, -1)
    tokens = tokens.astype(jnp.bfloat16)

    # One-hot CLS-row selector (B, B*S): pooled = P @ hidden.
    pool_sel = jnp.eye(batch * seq, dtype=jnp.bfloat16)[::seq]

    m, c = params["mora"], params["cls"]
    operands = [tokens, m["w"], m["b"], m["wih"], m["whh"], m["b_lstm"],
                m["w_halt"], m["b_halt"], m["s_expand"]]
    for lvl in m["levels"]:
        operands += [lvl["w1g"], lvl["b1g"], lvl["w2b"]]
    operands += [m["ln_g"], m["ln_b"], pool_sel,
                 c["dense_w"], c["dense_b"], c["out_w"], c["out_b"]]

    in_specs = [VMEM] * len(operands)
    in_specs[7] = SMEM                      # b_halt: (1,1) scalar lives in SMEM

    nl_pad = c["out_b"].shape[1]
    kernel = functools.partial(
        _mora_cls_kernel,
        num_levels=len(m["levels"]),
        max_steps=cfg["max_act_steps"],
        hidden=cfg["expert_hidden_size"],
        num_experts=cfg["num_experts_per_level"],
        out_features=cfg["out_features"],
        eps=1e-5)

    logits_pad = pl.pallas_call(
        kernel,
        out_shape=jax.ShapeDtypeStruct((batch, nl_pad), jnp.float32),
        in_specs=in_specs,
        out_specs=VMEM,
    )(*operands)
    return logits_pad[:, :cfg["num_labels"]]


# ----------------------------------------------------------------------------
# Deterministic parameter initialization (kernel-friendly packed/padded layout)
# ----------------------------------------------------------------------------
def init_params(key, cfg):
    keys = iter(jax.random.split(key, 64))
    bf = jnp.bfloat16

    def uni(shape, bound):
        return jax.random.uniform(next(keys), shape, jnp.float32, -bound, bound)

    def lin(fan_in, fan_out):
        b = 1.0 / math.sqrt(fan_in)
        return uni((fan_in, fan_out), b), uni((1, fan_out), b)

    def pad_cols(a, width):
        return jnp.pad(a, ((0, 0), (0, width - a.shape[1])))

    def pad_rows(a, height):
        return jnp.pad(a, ((0, height - a.shape[0]), (0, 0)))

    IN, OUT = cfg["in_features"], cfg["out_features"]
    H = cfg["expert_hidden_size"]
    E = cfg["num_experts_per_level"]
    L = cfg["num_levels"]
    NL = cfg["num_labels"]
    OUTP = _round_up(OUT, LANE)
    NLP = _round_up(NL, LANE)

    # Base linear of MoRALinear (true width, then zero-padded to 128 lanes).
    w, b = lin(IN, OUT)

    # ACT LSTMCell (weights pre-transposed to (in, 4H); b_ih + b_hh folded).
    kb = 1.0 / math.sqrt(H)
    wih = uni((IN, 4 * H), kb)
    whh = uni((H, 4 * H), kb)
    b_lstm = uni((1, 4 * H), kb) + uni((1, 4 * H), kb)
    w_halt = uni((1, H), kb)                      # halting nn.Linear(H, 1)
    b_halt = uni((1, 1), kb)

    # Hierarchical experts, packed lane-dense.  Gate columns are folded into
    # the packed fc1 weight; fc2 biases are folded into the fc2 contraction.
    levels = []
    for i in range(L):
        in_sz = IN if i == 0 else H
        out_sz = OUT if i == L - 1 else H
        out_pad = OUTP if i == L - 1 else H
        k1, k2 = 1.0 / math.sqrt(in_sz), 1.0 / math.sqrt(H)
        w1p = uni((in_sz, E * H), k1)             # fc1 of all experts, concat
        b1p = uni((1, E * H), k1)
        wg, bg = lin(in_sz, E)                    # gating linear
        w2p = uni((E * H, out_sz), k2)            # fc2 of all experts, stacked
        b2s = uni((E, out_sz), k2)                # per-expert fc2 bias
        levels.append({
            "w1g": jnp.concatenate([w1p, wg], axis=1).astype(bf),
            "b1g": jnp.concatenate([b1p, bg], axis=1),
            "w2b": pad_cols(jnp.concatenate([w2p, b2s], axis=0),
                            out_pad).astype(bf),
        })

    mora = {
        "w": pad_cols(w, OUTP).astype(bf),
        "b": pad_cols(b, OUTP),
        "wih": wih.astype(bf),
        "whh": whh.astype(bf),
        "b_lstm": b_lstm,
        "w_halt": w_halt,
        "b_halt": b_halt,
        # block-row selector: expands (N, E) combine weights to (N, E*H)
        "s_expand": jnp.kron(jnp.eye(E, dtype=jnp.float32),
                             jnp.ones((1, H), jnp.float32)).astype(bf),
        "levels": levels,
        "ln_g": pad_cols(jnp.ones((1, OUT), jnp.float32), OUTP),
        "ln_b": jnp.zeros((1, OUTP), jnp.float32),
    }

    # Classifier head (dense -> tanh -> out_proj), zero-padded lane-dense.
    dense_w, dense_b = lin(OUT, OUT)
    out_w, out_b = lin(OUT, NL)
    cls = {
        "dense_w": pad_cols(pad_rows(dense_w, OUTP), OUTP).astype(bf),
        "dense_b": pad_cols(dense_b, OUTP),
        "out_w": pad_cols(pad_rows(out_w, OUTP), NLP).astype(bf),
        "out_b": pad_cols(out_b, NLP),
    }

    embedding = jax.random.normal(next(keys), (cfg["vocab_size"], IN),
                                  jnp.float32) * 0.02

    return {"embedding": embedding, "mora": mora, "cls": cls}


# ----------------------------------------------------------------------------
if __name__ == "__main__":
    cfg = {
        "num_levels": 2,
        "num_experts_per_level": 4,
        # NOTE: the reference only type-checks when expert_hidden_size ==
        # in_features (ACT output feeds level-0 experts), so keep them equal.
        "expert_hidden_size": 32,
        "in_features": 32,
        "out_features": 32,
        "max_act_steps": 2,
        "num_labels": 2,
        "vocab_size": 50,
    }

    key = jax.random.PRNGKey(0)
    pkey, ikey = jax.random.split(key)
    params = init_params(pkey, cfg)

    batch, seq = 2, 8
    input_ids = jax.random.randint(ikey, (batch, seq), 0, cfg["vocab_size"],
                                   dtype=jnp.int32)
    attention_mask = jnp.ones((batch, seq), jnp.int32)

    fwd = jax.jit(functools.partial(mora_for_sequence_classification, cfg=cfg))
    logits = fwd(params, input_ids, attention_mask)
    jax.block_until_ready(logits)

    assert logits.shape == (batch, cfg["num_labels"])
    assert bool(jnp.all(jnp.isfinite(logits)))
    print("KERNEL_OK")
</pallas_src>

<mosaic_0001>
module attributes {stable_mosaic.version = 11 : i64} {
  func.func @_mora_cls_kernel(%arg0: memref<16x32xbf16, #tpu.memory_space<vmem>>, %arg1: memref<32x128xbf16, #tpu.memory_space<vmem>>, %arg2: memref<1x128xf32, #tpu.memory_space<vmem>>, %arg3: memref<32x128xbf16, #tpu.memory_space<vmem>>, %arg4: memref<32x128xbf16, #tpu.memory_space<vmem>>, %arg5: memref<1x128xf32, #tpu.memory_space<vmem>>, %arg6: memref<1x32xf32, #tpu.memory_space<vmem>>, %arg7: memref<1x1xf32, #tpu.memory_space<smem>>, %arg8: memref<4x128xbf16, #tpu.memory_space<vmem>>, %arg9: memref<32x132xbf16, #tpu.memory_space<vmem>>, %arg10: memref<1x132xf32, #tpu.memory_space<vmem>>, %arg11: memref<132x32xbf16, #tpu.memory_space<vmem>>, %arg12: memref<32x132xbf16, #tpu.memory_space<vmem>>, %arg13: memref<1x132xf32, #tpu.memory_space<vmem>>, %arg14: memref<132x128xbf16, #tpu.memory_space<vmem>>, %arg15: memref<1x128xf32, #tpu.memory_space<vmem>>, %arg16: memref<1x128xf32, #tpu.memory_space<vmem>>, %arg17: memref<2x16xbf16, #tpu.memory_space<vmem>>, %arg18: memref<128x128xbf16, #tpu.memory_space<vmem>>, %arg19: memref<1x128xf32, #tpu.memory_space<vmem>>, %arg20: memref<128x128xbf16, #tpu.memory_space<vmem>>, %arg21: memref<1x128xf32, #tpu.memory_space<vmem>>, %arg22: memref<2x128xf32, #tpu.memory_space<vmem>>) attributes {dimension_semantics = [], scalar_prefetch = 0 : i64, scratch_operands = 0 : i64, tpu.core_type = #tpu.core_type<tc>} {
    %c0 = arith.constant 0 : index
    %c0_0 = arith.constant 0 : index
    %0 = vector.load %arg0[%c0, %c0_0] : memref<16x32xbf16, #tpu.memory_space<vmem>>, vector<16x32xbf16>
    %c0_1 = arith.constant 0 : index
    %c0_2 = arith.constant 0 : index
    %1 = vector.load %arg1[%c0_1, %c0_2] : memref<32x128xbf16, #tpu.memory_space<vmem>>, vector<32x128xbf16>
    %cst = arith.constant dense<0.000000e+00> : vector<16x128xf32>
    %2 = tpu.matmul %0, %1, %cst {dimension_numbers = #tpu.dot_dimension_numbers<[1], [0], [0], [1], [0, 0, 1, 1], [], []>} : vector<16x32xbf16>, vector<32x128xbf16>, vector<16x128xf32> -> vector<16x128xf32>
    %c0_3 = arith.constant 0 : index
    %c0_4 = arith.constant 0 : index
    %3 = vector.load %arg2[%c0_3, %c0_4] : memref<1x128xf32, #tpu.memory_space<vmem>>, vector<1x128xf32>
    %4 = vector.broadcast %3 : vector<1x128xf32> to vector<16x128xf32>
    %5 = arith.addf %2, %4 : vector<16x128xf32>
    %c0_5 = arith.constant 0 : index
    %c0_6 = arith.constant 0 : index
    %6 = vector.load %arg3[%c0_5, %c0_6] : memref<32x128xbf16, #tpu.memory_space<vmem>>, vector<32x128xbf16>
    %cst_7 = arith.constant dense<0.000000e+00> : vector<16x128xf32>
    %7 = tpu.matmul %0, %6, %cst_7 {dimension_numbers = #tpu.dot_dimension_numbers<[1], [0], [0], [1], [0, 0, 1, 1], [], []>} : vector<16x32xbf16>, vector<32x128xbf16>, vector<16x128xf32> -> vector<16x128xf32>
    %c0_8 = arith.constant 0 : index
    %c0_9 = arith.constant 0 : index
    %8 = vector.load %arg5[%c0_8, %c0_9] : memref<1x128xf32, #tpu.memory_space<vmem>>, vector<1x128xf32>
    %9 = vector.broadcast %8 : vector<1x128xf32> to vector<16x128xf32>
    %10 = arith.addf %7, %9 : vector<16x128xf32>
    %c0_10 = arith.constant 0 : index
    %c0_11 = arith.constant 0 : index
    %11 = vector.load %arg4[%c0_10, %c0_11] : memref<32x128xbf16, #tpu.memory_space<vmem>>, vector<32x128xbf16>
    %c0_12 = arith.constant 0 : index
    %c0_13 = arith.constant 0 : index
    %12 = vector.load %arg6[%c0_12, %c0_13] : memref<1x32xf32, #tpu.memory_space<vmem>>, vector<1x32xf32>
    %c0_14 = arith.constant 0 : index
    %c0_15 = arith.constant 0 : index
    %13 = memref.load %arg7[%c0_14, %c0_15] : memref<1x1xf32, #tpu.memory_space<smem>>
    %cst_16 = arith.constant 0.000000e+00 : f32
    %14 = vector.broadcast %cst_16 : f32 to vector<16x32xf32>
    %cst_17 = arith.constant 0.000000e+00 : f32
    %15 = vector.broadcast %cst_17 : f32 to vector<16x1xf32>
    %cst_18 = arith.constant 1.000000e+00 : f32
    %16 = vector.broadcast %cst_18 : f32 to vector<1x1xf32>
    %c0_i32 = arith.constant 0 : i32
    %cst_19 = arith.constant dense<0x7F800000> : vector<1xf32>
    %17 = vector.multi_reduction <minimumf>, %15, %cst_19 [0] : vector<16x1xf32> to vector<1xf32>
    %18 = vector.shape_cast %17 : vector<1xf32> to vector<1x1xf32>
    %cst_20 = arith.constant 9.900000e-01 : f32
    %19 = vector.broadcast %cst_20 : f32 to vector<1x1xf32>
    %20 = arith.cmpf ole, %18, %19 : vector<1x1xf32>
    %21 = arith.extui %20 : vector<1x1xi1> to vector<1x1xi32>
    %22 = arith.sitofp %21 : vector<1x1xi32> to vector<1x1xf32>
    %23 = arith.mulf %16, %22 : vector<1x1xf32>
    %24 = arith.truncf %14 : vector<16x32xf32> to vector<16x32xbf16>
    %cst_21 = arith.constant dense<0.000000e+00> : vector<16x128xf32>
    %25 = tpu.matmul %24, %11, %cst_21 {dimension_numbers = #tpu.dot_dimension_numbers<[1], [0], [0], [1], [0, 0, 1, 1], [], []>} : vector<16x32xbf16>, vector<32x128xbf16>, vector<16x128xf32> -> vector<16x128xf32>
    %26 = arith.addf %10, %25 : vector<16x128xf32>
    %27 = arith.negf %26 : vector<16x128xf32>
    %28 = math.exp %27 : vector<16x128xf32>
    %cst_22 = arith.constant 1.000000e+00 : f32
    %29 = vector.broadcast %cst_22 : f32 to vector<16x128xf32>
    %30 = arith.addf %29, %28 : vector<16x128xf32>
    %31 = arith.divf %29, %30 : vector<16x128xf32>
    %32 = math.tanh %26 : vector<16x128xf32>
    %33 = vector.extract_strided_slice %31 {offsets = [0, 0], sizes = [16, 32], strides = [1, 1]} : vector<16x128xf32> to vector<16x32xf32>
    %34 = vector.extract_strided_slice %31 {offsets = [0, 32], sizes = [16, 32], strides = [1, 1]} : vector<16x128xf32> to vector<16x32xf32>
    %35 = vector.extract_strided_slice %32 {offsets = [0, 64], sizes = [16, 32], strides = [1, 1]} : vector<16x128xf32> to vector<16x32xf32>
    %36 = vector.extract_strided_slice %31 {offsets = [0, 96], sizes = [16, 32], strides = [1, 1]} : vector<16x128xf32> to vector<16x32xf32>
    %37 = arith.mulf %34, %14 : vector<16x32xf32>
    %38 = arith.mulf %33, %35 : vector<16x32xf32>
    %39 = arith.addf %37, %38 : vector<16x32xf32>
    %40 = math.tanh %39 : vector<16x32xf32>
    %41 = arith.mulf %36, %40 : vector<16x32xf32>
    %42 = vector.broadcast %12 : vector<1x32xf32> to vector<16x32xf32>
    %43 = arith.mulf %41, %42 : vector<16x32xf32>
    %cst_23 = arith.constant dense<0.000000e+00> : vector<16xf32>
    %44 = vector.multi_reduction <add>, %43, %cst_23 [1] : vector<16x32xf32> to vector<16xf32>
    %45 = vector.shape_cast %44 : vector<16xf32> to vector<16x1xf32>
    %46 = vector.broadcast %13 : f32 to vector<16x1xf32>
    %47 = arith.addf %45, %46 : vector<16x1xf32>
    %48 = arith.negf %47 : vector<16x1xf32>
    %49 = math.exp %48 : vector<16x1xf32>
    %cst_24 = arith.constant 1.000000e+00 : f32
    %50 = vector.broadcast %cst_24 : f32 to vector<16x1xf32>
    %51 = arith.addf %50, %49 : vector<16x1xf32>
    %52 = arith.divf %50, %51 : vector<16x1xf32>
    %53 = arith.subf %41, %14 : vector<16x32xf32>
    %54 = vector.broadcast %23 : vector<1x1xf32> to vector<16x32xf32>
    %55 = arith.mulf %54, %53 : vector<16x32xf32>
    %56 = arith.addf %14, %55 : vector<16x32xf32>
    %57 = arith.subf %39, %14 : vector<16x32xf32>
    %58 = vector.broadcast %23 : vector<1x1xf32> to vector<16x32xf32>
    %59 = arith.mulf %58, %57 : vector<16x32xf32>
    %60 = arith.addf %14, %59 : vector<16x32xf32>
    %cst_25 = arith.constant 1.000000e+00 : f32
    %61 = vector.broadcast %cst_25 : f32 to vector<16x1xf32>
    %62 = arith.subf %61, %15 : vector<16x1xf32>
    %63 = arith.mulf %52, %62 : vector<16x1xf32>
    %64 = arith.addf %15, %63 : vector<16x1xf32>
    %65 = arith.subf %64, %15 : vector<16x1xf32>
    %66 = vector.broadcast %23 : vector<1x1xf32> to vector<16x1xf32>
    %67 = arith.mulf %66, %65 : vector<16x1xf32>
    %68 = arith.addf %15, %67 : vector<16x1xf32>
    %cst_26 = arith.constant 1.000000e+00 : f32
    %69 = vector.broadcast %cst_26 : f32 to vector<16x1xf32>
    %70 = arith.subf %69, %68 : vector<16x1xf32>
    %71 = vector.broadcast %23 : vector<1x1xf32> to vector<16x1xf32>
    %72 = arith.mulf %71, %70 : vector<16x1xf32>
    %73 = arith.addf %15, %72 : vector<16x1xf32>
    %74 = vector.broadcast %23 : vector<1x1xf32> to vector<16x1xf32>
    %75 = arith.addf %15, %74 : vector<16x1xf32>
    %76 = vector.broadcast %23 : vector<1x1xf32> to vector<16x32xf32>
    %77 = arith.mulf %76, %41 : vector<16x32xf32>
    %78 = arith.addf %14, %77 : vector<16x32xf32>
    %c1_i32 = arith.constant 1 : i32
    %cst_27 = arith.constant dense<0x7F800000> : vector<1xf32>
    %79 = vector.multi_reduction <minimumf>, %68, %cst_27 [0] : vector<16x1xf32> to vector<1xf32>
    %80 = vector.shape_cast %79 : vector<1xf32> to vector<1x1xf32>
    %cst_28 = arith.constant 9.900000e-01 : f32
    %81 = vector.broadcast %cst_28 : f32 to vector<1x1xf32>
    %82 = arith.cmpf ole, %80, %81 : vector<1x1xf32>
    %83 = arith.extui %82 : vector<1x1xi1> to vector<1x1xi32>
    %84 = arith.sitofp %83 : vector<1x1xi32> to vector<1x1xf32>
    %85 = arith.mulf %23, %84 : vector<1x1xf32>
    %86 = arith.truncf %56 : vector<16x32xf32> to vector<16x32xbf16>
    %cst_29 = arith.constant dense<0.000000e+00> : vector<16x128xf32>
    %87 = tpu.matmul %86, %11, %cst_29 {dimension_numbers = #tpu.dot_dimension_numbers<[1], [0], [0], [1], [0, 0, 1, 1], [], []>} : vector<16x32xbf16>, vector<32x128xbf16>, vector<16x128xf32> -> vector<16x128xf32>
    %88 = arith.addf %10, %87 : vector<16x128xf32>
    %89 = arith.negf %88 : vector<16x128xf32>
    %90 = math.exp %89 : vector<16x128xf32>
    %cst_30 = arith.constant 1.000000e+00 : f32
    %91 = vector.broadcast %cst_30 : f32 to vector<16x128xf32>
    %92 = arith.addf %91, %90 : vector<16x128xf32>
    %93 = arith.divf %91, %92 : vector<16x128xf32>
    %94 = math.tanh %88 : vector<16x128xf32>
    %95 = vector.extract_strided_slice %93 {offsets = [0, 0], sizes = [16, 32], strides = [1, 1]} : vector<16x128xf32> to vector<16x32xf32>
    %96 = vector.extract_strided_slice %93 {offsets = [0, 32], sizes = [16, 32], strides = [1, 1]} : vector<16x128xf32> to vector<16x32xf32>
    %97 = vector.extract_strided_slice %94 {offsets = [0, 64], sizes = [16, 32], strides = [1, 1]} : vector<16x128xf32> to vector<16x32xf32>
    %98 = vector.extract_strided_slice %93 {offsets = [0, 96], sizes = [16, 32], strides = [1, 1]} : vector<16x128xf32> to vector<16x32xf32>
    %99 = arith.mulf %96, %60 : vector<16x32xf32>
    %100 = arith.mulf %95, %97 : vector<16x32xf32>
    %101 = arith.addf %99, %100 : vector<16x32xf32>
    %102 = math.tanh %101 : vector<16x32xf32>
    %103 = arith.mulf %98, %102 : vector<16x32xf32>
    %104 = vector.broadcast %12 : vector<1x32xf32> to vector<16x32xf32>
    %105 = arith.mulf %103, %104 : vector<16x32xf32>
    %cst_31 = arith.constant dense<0.000000e+00> : vector<16xf32>
    %106 = vector.multi_reduction <add>, %105, %cst_31 [1] : vector<16x32xf32> to vector<16xf32>
    %107 = vector.shape_cast %106 : vector<16xf32> to vector<16x1xf32>
    %108 = vector.broadcast %13 : f32 to vector<16x1xf32>
    %109 = arith.addf %107, %108 : vector<16x1xf32>
    %110 = arith.negf %109 : vector<16x1xf32>
    %111 = math.exp %110 : vector<16x1xf32>
    %cst_32 = arith.constant 1.000000e+00 : f32
    %112 = vector.broadcast %cst_32 : f32 to vector<16x1xf32>
    %113 = arith.addf %112, %111 : vector<16x1xf32>
    %114 = arith.divf %112, %113 : vector<16x1xf32>
    %115 = arith.subf %103, %56 : vector<16x32xf32>
    %116 = vector.broadcast %85 : vector<1x1xf32> to vector<16x32xf32>
    %117 = arith.mulf %116, %115 : vector<16x32xf32>
    %118 = arith.addf %56, %117 : vector<16x32xf32>
    %119 = arith.subf %101, %60 : vector<16x32xf32>
    %120 = vector.broadcast %85 : vector<1x1xf32> to vector<16x32xf32>
    %121 = arith.mulf %120, %119 : vector<16x32xf32>
    %122 = arith.addf %60, %121 : vector<16x32xf32>
    %cst_33 = arith.constant 1.000000e+00 : f32
    %123 = vector.broadcast %cst_33 : f32 to vector<16x1xf32>
    %124 = arith.subf %123, %68 : vector<16x1xf32>
    %125 = arith.mulf %114, %124 : vector<16x1xf32>
    %126 = arith.addf %68, %125 : vector<16x1xf32>
    %127 = arith.subf %126, %68 : vector<16x1xf32>
    %128 = vector.broadcast %85 : vector<1x1xf32> to vector<16x1xf32>
    %129 = arith.mulf %128, %127 : vector<16x1xf32>
    %130 = arith.addf %68, %129 : vector<16x1xf32>
    %cst_34 = arith.constant 1.000000e+00 : f32
    %131 = vector.broadcast %cst_34 : f32 to vector<16x1xf32>
    %132 = arith.subf %131, %130 : vector<16x1xf32>
    %133 = vector.broadcast %85 : vector<1x1xf32> to vector<16x1xf32>
    %134 = arith.mulf %133, %132 : vector<16x1xf32>
    %135 = arith.addf %73, %134 : vector<16x1xf32>
    %136 = vector.broadcast %85 : vector<1x1xf32> to vector<16x1xf32>
    %137 = arith.addf %75, %136 : vector<16x1xf32>
    %138 = vector.broadcast %85 : vector<1x1xf32> to vector<16x32xf32>
    %139 = arith.mulf %138, %103 : vector<16x32xf32>
    %140 = arith.addf %78, %139 : vector<16x32xf32>
    %141 = arith.divf %135, %137 : vector<16x1xf32>
    %142 = vector.broadcast %141 : vector<16x1xf32> to vector<16x32xf32>
    %143 = arith.mulf %140, %142 : vector<16x32xf32>
    %c0_35 = arith.constant 0 : index
    %c0_36 = arith.constant 0 : index
    %144 = vector.load %arg8[%c0_35, %c0_36] : memref<4x128xbf16, #tpu.memory_space<vmem>>, vector<4x128xbf16>
    %145 = arith.truncf %143 : vector<16x32xf32> to vector<16x32xbf16>
    %c0_37 = arith.constant 0 : index
    %c0_38 = arith.constant 0 : index
    %146 = vector.load %arg9[%c0_37, %c0_38] : memref<32x132xbf16, #tpu.memory_space<vmem>>, vector<32x132xbf16>
    %cst_39 = arith.constant dense<0.000000e+00> : vector<16x132xf32>
    %147 = tpu.matmul %145, %146, %cst_39 {dimension_numbers = #tpu.dot_dimension_numbers<[1], [0], [0], [1], [0, 0, 1, 1], [], []>} : vector<16x32xbf16>, vector<32x132xbf16>, vector<16x132xf32> -> vector<16x132xf32>
    %c0_40 = arith.constant 0 : index
    %c0_41 = arith.constant 0 : index
    %148 = vector.load %arg10[%c0_40, %c0_41] : memref<1x132xf32, #tpu.memory_space<vmem>>, vector<1x132xf32>
    %149 = vector.broadcast %148 : vector<1x132xf32> to vector<16x132xf32>
    %150 = arith.addf %147, %149 : vector<16x132xf32>
    %151 = vector.extract_strided_slice %150 {offsets = [0, 0], sizes = [16, 128], strides = [1, 1]} : vector<16x132xf32> to vector<16x128xf32>
    %cst_42 = arith.constant 0.000000e+00 : f32
    %152 = vector.broadcast %cst_42 : f32 to vector<16x128xf32>
    %153 = arith.maximumf %151, %152 : vector<16x128xf32>
    %154 = vector.extract_strided_slice %150 {offsets = [0, 128], sizes = [16, 4], strides = [1, 1]} : vector<16x132xf32> to vector<16x4xf32>
    %155 = tpu.iota {dimensions = array<i32: 1>} : vector<16x4xi32>
    %cst_43 = arith.constant dense<0xFF800000> : vector<16xf32>
    %156 = vector.multi_reduction <maximumf>, %154, %cst_43 [1] : vector<16x4xf32> to vector<16xf32>
    %157 = vector.shape_cast %156 : vector<16xf32> to vector<16x1xf32>
    %158 = vector.broadcast %157 : vector<16x1xf32> to vector<16x4xf32>
    %159 = arith.cmpf oge, %154, %158 : vector<16x4xf32>
    %c4_i32 = arith.constant 4 : i32
    %160 = vector.broadcast %c4_i32 : i32 to vector<16x4xi32>
    %161 = arith.select %159, %155, %160 : vector<16x4xi1>, vector<16x4xi32>
    %cst_44 = arith.constant dense<2147483647> : vector<16xi32>
    %162 = vector.multi_reduction <minsi>, %161, %cst_44 [1] : vector<16x4xi32> to vector<16xi32>
    %163 = vector.shape_cast %162 : vector<16xi32> to vector<16x1xi32>
    %164 = vector.broadcast %163 : vector<16x1xi32> to vector<16x4xi32>
    %165 = arith.cmpi eq, %155, %164 : vector<16x4xi32>
    %cst_45 = arith.constant -1.000000e+30 : f32
    %166 = vector.broadcast %cst_45 : f32 to vector<16x4xf32>
    %167 = arith.select %165, %166, %154 : vector<16x4xi1>, vector<16x4xf32>
    %cst_46 = arith.constant dense<0xFF800000> : vector<16xf32>
    %168 = vector.multi_reduction <maximumf>, %167, %cst_46 [1] : vector<16x4xf32> to vector<16xf32>
    %169 = vector.shape_cast %168 : vector<16xf32> to vector<16x1xf32>
    %170 = vector.broadcast %169 : vector<16x1xf32> to vector<16x4xf32>
    %171 = arith.cmpf oge, %167, %170 : vector<16x4xf32>
    %c4_i32_47 = arith.constant 4 : i32
    %172 = vector.broadcast %c4_i32_47 : i32 to vector<16x4xi32>
    %173 = arith.select %171, %155, %172 : vector<16x4xi1>, vector<16x4xi32>
    %cst_48 = arith.constant dense<2147483647> : vector<16xi32>
    %174 = vector.multi_reduction <minsi>, %173, %cst_48 [1] : vector<16x4xi32> to vector<16xi32>
    %175 = vector.shape_cast %174 : vector<16xi32> to vector<16x1xi32>
    %176 = vector.broadcast %175 : vector<16x1xi32> to vector<16x4xi32>
    %177 = arith.cmpi eq, %155, %176 : vector<16x4xi32>
    %178 = arith.subf %169, %157 : vector<16x1xf32>
    %179 = math.exp %178 : vector<16x1xf32>
    %cst_49 = arith.constant 1.000000e+00 : f32
    %180 = vector.broadcast %cst_49 : f32 to vector<16x1xf32>
    %181 = arith.addf %180, %179 : vector<16x1xf32>
    %cst_50 = arith.constant 1.000000e+00 : f32
    %182 = vector.broadcast %cst_50 : f32 to vector<16x1xf32>
    %183 = arith.divf %182, %181 : vector<16x1xf32>
    %cst_51 = arith.constant 0.000000e+00 : f32
    %184 = vector.shape_cast %183 : vector<16x1xf32> to vector<16x1xf32>
    %185 = vector.broadcast %184 : vector<16x1xf32> to vector<16x4xf32>
    %186 = vector.broadcast %cst_51 : f32 to vector<16x4xf32>
    %187 = arith.select %165, %185, %186 : vector<16x4xi1>, vector<16x4xf32>
    %188 = arith.mulf %179, %183 : vector<16x1xf32>
    %cst_52 = arith.constant 0.000000e+00 : f32
    %189 = vector.shape_cast %188 : vector<16x1xf32> to vector<16x1xf32>
    %190 = vector.broadcast %189 : vector<16x1xf32> to vector<16x4xf32>
    %191 = vector.broadcast %cst_52 : f32 to vector<16x4xf32>
    %192 = arith.select %177, %190, %191 : vector<16x4xi1>, vector<16x4xf32>
    %193 = arith.addf %187, %192 : vector<16x4xf32>
    %194 = arith.truncf %193 : vector<16x4xf32> to vector<16x4xbf16>
    %cst_53 = arith.constant dense<0.000000e+00> : vector<16x128xf32>
    %195 = tpu.matmul %194, %144, %cst_53 {dimension_numbers = #tpu.dot_dimension_numbers<[1], [0], [0], [1], [0, 0, 1, 1], [], []>} : vector<16x4xbf16>, vector<4x128xbf16>, vector<16x128xf32> -> vector<16x128xf32>
    %196 = arith.mulf %153, %195 : vector<16x128xf32>
    %197 = tpu.concatenate %196, %193 in 1 : vector<16x128xf32>, vector<16x4xf32> -> vector<16x132xf32>
    %198 = arith.truncf %197 : vector<16x132xf32> to vector<16x132xbf16>
    %c0_54 = arith.constant 0 : index
    %c0_55 = arith.constant 0 : index
    %199 = vector.load %arg11[%c0_54, %c0_55] : memref<132x32xbf16, #tpu.memory_space<vmem>>, vector<132x32xbf16>
    %cst_56 = arith.constant dense<0.000000e+00> : vector<16x32xf32>
    %200 = tpu.matmul %198, %199, %cst_56 {dimension_numbers = #tpu.dot_dimension_numbers<[1], [0], [0], [1], [0, 0, 1, 1], [], []>} : vector<16x132xbf16>, vector<132x32xbf16>, vector<16x32xf32> -> vector<16x32xf32>
    %201 = arith.truncf %200 : vector<16x32xf32> to vector<16x32xbf16>
    %c0_57 = arith.constant 0 : index
    %c0_58 = arith.constant 0 : index
    %202 = vector.load %arg12[%c0_57, %c0_58] : memref<32x132xbf16, #tpu.memory_space<vmem>>, vector<32x132xbf16>
    %cst_59 = arith.constant dense<0.000000e+00> : vector<16x132xf32>
    %203 = tpu.matmul %201, %202, %cst_59 {dimension_numbers = #tpu.dot_dimension_numbers<[1], [0], [0], [1], [0, 0, 1, 1], [], []>} : vector<16x32xbf16>, vector<32x132xbf16>, vector<16x132xf32> -> vector<16x132xf32>
    %c0_60 = arith.constant 0 : index
    %c0_61 = arith.constant 0 : index
    %204 = vector.load %arg13[%c0_60, %c0_61] : memref<1x132xf32, #tpu.memory_space<vmem>>, vector<1x132xf32>
    %205 = vector.broadcast %204 : vector<1x132xf32> to vector<16x132xf32>
    %206 = arith.addf %203, %205 : vector<16x132xf32>
    %207 = vector.extract_strided_slice %206 {offsets = [0, 0], sizes = [16, 128], strides = [1, 1]} : vector<16x132xf32> to vector<16x128xf32>
    %cst_62 = arith.constant 0.000000e+00 : f32
    %208 = vector.broadcast %cst_62 : f32 to vector<16x128xf32>
    %209 = arith.maximumf %207, %208 : vector<16x128xf32>
    %210 = vector.extract_strided_slice %206 {offsets = [0, 128], sizes = [16, 4], strides = [1, 1]} : vector<16x132xf32> to vector<16x4xf32>
    %211 = tpu.iota {dimensions = array<i32: 1>} : vector<16x4xi32>
    %cst_63 = arith.constant dense<0xFF800000> : vector<16xf32>
    %212 = vector.multi_reduction <maximumf>, %210, %cst_63 [1] : vector<16x4xf32> to vector<16xf32>
    %213 = vector.shape_cast %212 : vector<16xf32> to vector<16x1xf32>
    %214 = vector.broadcast %213 : vector<16x1xf32> to vector<16x4xf32>
    %215 = arith.cmpf oge, %210, %214 : vector<16x4xf32>
    %c4_i32_64 = arith.constant 4 : i32
    %216 = vector.broadcast %c4_i32_64 : i32 to vector<16x4xi32>
    %217 = arith.select %215, %211, %216 : vector<16x4xi1>, vector<16x4xi32>
    %cst_65 = arith.constant dense<2147483647> : vector<16xi32>
    %218 = vector.multi_reduction <minsi>, %217, %cst_65 [1] : vector<16x4xi32> to vector<16xi32>
    %219 = vector.shape_cast %218 : vector<16xi32> to vector<16x1xi32>
    %220 = vector.broadcast %219 : vector<16x1xi32> to vector<16x4xi32>
    %221 = arith.cmpi eq, %211, %220 : vector<16x4xi32>
    %cst_66 = arith.constant -1.000000e+30 : f32
    %222 = vector.broadcast %cst_66 : f32 to vector<16x4xf32>
    %223 = arith.select %221, %222, %210 : vector<16x4xi1>, vector<16x4xf32>
    %cst_67 = arith.constant dense<0xFF800000> : vector<16xf32>
    %224 = vector.multi_reduction <maximumf>, %223, %cst_67 [1] : vector<16x4xf32> to vector<16xf32>
    %225 = vector.shape_cast %224 : vector<16xf32> to vector<16x1xf32>
    %226 = vector.broadcast %225 : vector<16x1xf32> to vector<16x4xf32>
    %227 = arith.cmpf oge, %223, %226 : vector<16x4xf32>
    %c4_i32_68 = arith.constant 4 : i32
    %228 = vector.broadcast %c4_i32_68 : i32 to vector<16x4xi32>
    %229 = arith.select %227, %211, %228 : vector<16x4xi1>, vector<16x4xi32>
    %cst_69 = arith.constant dense<2147483647> : vector<16xi32>
    %230 = vector.multi_reduction <minsi>, %229, %cst_69 [1] : vector<16x4xi32> to vector<16xi32>
    %231 = vector.shape_cast %230 : vector<16xi32> to vector<16x1xi32>
    %232 = vector.broadcast %231 : vector<16x1xi32> to vector<16x4xi32>
    %233 = arith.cmpi eq, %211, %232 : vector<16x4xi32>
    %234 = arith.subf %225, %213 : vector<16x1xf32>
    %235 = math.exp %234 : vector<16x1xf32>
    %cst_70 = arith.constant 1.000000e+00 : f32
    %236 = vector.broadcast %cst_70 : f32 to vector<16x1xf32>
    %237 = arith.addf %236, %235 : vector<16x1xf32>
    %cst_71 = arith.constant 1.000000e+00 : f32
    %238 = vector.broadcast %cst_71 : f32 to vector<16x1xf32>
    %239 = arith.divf %238, %237 : vector<16x1xf32>
    %cst_72 = arith.constant 0.000000e+00 : f32
    %240 = vector.shape_cast %239 : vector<16x1xf32> to vector<16x1xf32>
    %241 = vector.broadcast %240 : vector<16x1xf32> to vector<16x4xf32>
    %242 = vector.broadcast %cst_72 : f32 to vector<16x4xf32>
    %243 = arith.select %221, %241, %242 : vector<16x4xi1>, vector<16x4xf32>
    %244 = arith.mulf %235, %239 : vector<16x1xf32>
    %cst_73 = arith.constant 0.000000e+00 : f32
    %245 = vector.shape_cast %244 : vector<16x1xf32> to vector<16x1xf32>
    %246 = vector.broadcast %245 : vector<16x1xf32> to vector<16x4xf32>
    %247 = vector.broadcast %cst_73 : f32 to vector<16x4xf32>
    %248 = arith.select %233, %246, %247 : vector<16x4xi1>, vector<16x4xf32>
    %249 = arith.addf %243, %248 : vector<16x4xf32>
    %250 = arith.truncf %249 : vector<16x4xf32> to vector<16x4xbf16>
    %cst_74 = arith.constant dense<0.000000e+00> : vector<16x128xf32>
    %251 = tpu.matmul %250, %144, %cst_74 {dimension_numbers = #tpu.dot_dimension_numbers<[1], [0], [0], [1], [0, 0, 1, 1], [], []>} : vector<16x4xbf16>, vector<4x128xbf16>, vector<16x128xf32> -> vector<16x128xf32>
    %252 = arith.mulf %209, %251 : vector<16x128xf32>
    %253 = tpu.concatenate %252, %249 in 1 : vector<16x128xf32>, vector<16x4xf32> -> vector<16x132xf32>
    %254 = arith.truncf %253 : vector<16x132xf32> to vector<16x132xbf16>
    %c0_75 = arith.constant 0 : index
    %c0_76 = arith.constant 0 : index
    %255 = vector.load %arg14[%c0_75, %c0_76] : memref<132x128xbf16, #tpu.memory_space<vmem>>, vector<132x128xbf16>
    %cst_77 = arith.constant dense<0.000000e+00> : vector<16x128xf32>
    %256 = tpu.matmul %254, %255, %cst_77 {dimension_numbers = #tpu.dot_dimension_numbers<[1], [0], [0], [1], [0, 0, 1, 1], [], []>} : vector<16x132xbf16>, vector<132x128xbf16>, vector<16x128xf32> -> vector<16x128xf32>
    %cst_78 = arith.constant dense<0.000000e+00> : vector<16xf32>
    %257 = vector.multi_reduction <add>, %256, %cst_78 [1] : vector<16x128xf32> to vector<16xf32>
    %258 = vector.shape_cast %257 : vector<16xf32> to vector<16x1xf32>
    %259 = arith.mulf %256, %256 : vector<16x128xf32>
    %cst_79 = arith.constant dense<0.000000e+00> : vector<16xf32>
    %260 = vector.multi_reduction <add>, %259, %cst_79 [1] : vector<16x128xf32> to vector<16xf32>
    %261 = vector.shape_cast %260 : vector<16xf32> to vector<16x1xf32>
    %cst_80 = arith.constant 3.125000e-02 : f32
    %262 = vector.broadcast %cst_80 : f32 to vector<16x1xf32>
    %263 = arith.mulf %258, %262 : vector<16x1xf32>
    %cst_81 = arith.constant 3.125000e-02 : f32
    %264 = vector.broadcast %cst_81 : f32 to vector<16x1xf32>
    %265 = arith.mulf %261, %264 : vector<16x1xf32>
    %266 = arith.mulf %263, %263 : vector<16x1xf32>
    %267 = arith.subf %265, %266 : vector<16x1xf32>
    %cst_82 = arith.constant 0.000000e+00 : f32
    %268 = vector.broadcast %cst_82 : f32 to vector<16x1xf32>
    %269 = arith.maximumf %267, %268 : vector<16x1xf32>
    %270 = vector.broadcast %263 : vector<16x1xf32> to vector<16x128xf32>
    %271 = arith.subf %256, %270 : vector<16x128xf32>
    %cst_83 = arith.constant 9.99999974E-6 : f32
    %272 = vector.broadcast %cst_83 : f32 to vector<16x1xf32>
    %273 = arith.addf %269, %272 : vector<16x1xf32>
    %274 = math.rsqrt %273 : vector<16x1xf32>
    %275 = vector.broadcast %274 : vector<16x1xf32> to vector<16x128xf32>
    %276 = arith.mulf %271, %275 : vector<16x128xf32>
    %c0_84 = arith.constant 0 : index
    %c0_85 = arith.constant 0 : index
    %277 = vector.load %arg15[%c0_84, %c0_85] : memref<1x128xf32, #tpu.memory_space<vmem>>, vector<1x128xf32>
    %278 = vector.broadcast %277 : vector<1x128xf32> to vector<16x128xf32>
    %279 = arith.mulf %276, %278 : vector<16x128xf32>
    %c0_86 = arith.constant 0 : index
    %c0_87 = arith.constant 0 : index
    %280 = vector.load %arg16[%c0_86, %c0_87] : memref<1x128xf32, #tpu.memory_space<vmem>>, vector<1x128xf32>
    %281 = vector.broadcast %280 : vector<1x128xf32> to vector<16x128xf32>
    %282 = arith.addf %279, %281 : vector<16x128xf32>
    %283 = arith.addf %5, %282 : vector<16x128xf32>
    %c0_88 = arith.constant 0 : index
    %c0_89 = arith.constant 0 : index
    %284 = vector.load %arg17[%c0_88, %c0_89] : memref<2x16xbf16, #tpu.memory_space<vmem>>, vector<2x16xbf16>
    %285 = arith.truncf %283 : vector<16x128xf32> to vector<16x128xbf16>
    %cst_90 = arith.constant dense<0.000000e+00> : vector<2x128xf32>
    %286 = tpu.matmul %284, %285, %cst_90 {dimension_numbers = #tpu.dot_dimension_numbers<[1], [0], [0], [1], [0, 0, 1, 1], [], []>} : vector<2x16xbf16>, vector<16x128xbf16>, vector<2x128xf32> -> vector<2x128xf32>
    %287 = arith.truncf %286 : vector<2x128xf32> to vector<2x128xbf16>
    %c0_91 = arith.constant 0 : index
    %c0_92 = arith.constant 0 : index
    %288 = vector.load %arg18[%c0_91, %c0_92] : memref<128x128xbf16, #tpu.memory_space<vmem>>, vector<128x128xbf16>
    %cst_93 = arith.constant dense<0.000000e+00> : vector<2x128xf32>
    %289 = tpu.matmul %287, %288, %cst_93 {dimension_numbers = #tpu.dot_dimension_numbers<[1], [0], [0], [1], [0, 0, 1, 1], [], []>} : vector<2x128xbf16>, vector<128x128xbf16>, vector<2x128xf32> -> vector<2x128xf32>
    %c0_94 = arith.constant 0 : index
    %c0_95 = arith.constant 0 : index
    %290 = vector.load %arg19[%c0_94, %c0_95] : memref<1x128xf32, #tpu.memory_space<vmem>>, vector<1x128xf32>
    %291 = vector.broadcast %290 : vector<1x128xf32> to vector<2x128xf32>
    %292 = arith.addf %289, %291 : vector<2x128xf32>
    %293 = math.tanh %292 : vector<2x128xf32>
    %294 = arith.truncf %293 : vector<2x128xf32> to vector<2x128xbf16>
    %c0_96 = arith.constant 0 : index
    %c0_97 = arith.constant 0 : index
    %295 = vector.load %arg20[%c0_96, %c0_97] : memref<128x128xbf16, #tpu.memory_space<vmem>>, vector<128x128xbf16>
    %cst_98 = arith.constant dense<0.000000e+00> : vector<2x128xf32>
    %296 = tpu.matmul %294, %295, %cst_98 {dimension_numbers = #tpu.dot_dimension_numbers<[1], [0], [0], [1], [0, 0, 1, 1], [], []>} : vector<2x128xbf16>, vector<128x128xbf16>, vector<2x128xf32> -> vector<2x128xf32>
    %c0_99 = arith.constant 0 : index
    %c0_100 = arith.constant 0 : index
    %297 = vector.load %arg21[%c0_99, %c0_100] : memref<1x128xf32, #tpu.memory_space<vmem>>, vector<1x128xf32>
    %298 = vector.broadcast %297 : vector<1x128xf32> to vector<2x128xf32>
    %299 = arith.addf %296, %298 : vector<2x128xf32>
    %c0_101 = arith.constant 0 : index
    %c0_102 = arith.constant 0 : index
    %300 = vector.load %arg22[%c0_101, %c0_102] : memref<2x128xf32, #tpu.memory_space<vmem>>, vector<2x128xf32>
    tpu.vector_store %arg22[%c0_101, %c0_102], %299 {strides = array<i32>} : memref<2x128xf32, #tpu.memory_space<vmem>>, vector<2x128xf32>,
    return
  }
}

</mosaic_0001>

<llo_original>
// kernel: mora_for_sequence_classification.1
$region0: #{mora_for_sequence_classification.1}
  #allocation0 [shape = 'u32[]', space=smem, size = 0x4, offset = 0x4, fixed_abs, tag = 'smem constant byte address 0x4 - core index']
  #allocation1 [shape = 'u32[72,128]{1,0:T(1,128)}', space=vmem, size = 0x9000, scoped, tag = 'internal scratch']
  #allocation2 [shape = 'f32[1,1]{1,0:T(1,128)S(6)}', space=smem, size = 0x200, scoped, tag = 'scoped memory for mora_for_sequence_classification.1']
  %s0 = inlined_call_operand.vmem [shape: bf16[16,32], index: 0, kind: input, shape index: {}]
  %s1 = inlined_call_operand.vmem [shape: bf16[32,128], index: 1, kind: input, shape index: {}]
  %s2 = inlined_call_operand.vmem [shape: f32[1,128], index: 2, kind: input, shape index: {}]
  %s3 = inlined_call_operand.vmem [shape: bf16[32,128], index: 3, kind: input, shape index: {}]
  %s4 = inlined_call_operand.hbm [shape: bf16[32,128], index: 4, kind: input, shape index: {}]
  %s5 = inlined_call_operand.vmem [shape: f32[1,128], index: 5, kind: input, shape index: {}]
  %s6 = inlined_call_operand.vmem [shape: f32[1,32], index: 6, kind: input, shape index: {}]
  %s7 = inlined_call_operand.<no memory space> [shape: f32[1,1], index: 7, kind: input, shape index: {}]
  %s8 = inlined_call_operand.vmem [shape: bf16[4,128], index: 8, kind: input, shape index: {}]
  %s9 = inlined_call_operand.hbm [shape: bf16[32,132], index: 9, kind: input, shape index: {}]
  %s10 = inlined_call_operand.vmem [shape: f32[1,132], index: 10, kind: input, shape index: {}]
  %s11 = inlined_call_operand.vmem [shape: bf16[132,32], index: 11, kind: input, shape index: {}]
  %s12 = inlined_call_operand.hbm [shape: bf16[32,132], index: 12, kind: input, shape index: {}]
  %s13 = inlined_call_operand.vmem [shape: f32[1,132], index: 13, kind: input, shape index: {}]
  %s14 = inlined_call_operand.vmem [shape: bf16[132,128], index: 14, kind: input, shape index: {}]
  %s15 = inlined_call_operand.vmem [shape: f32[1,128], index: 15, kind: input, shape index: {}]
  %s16 = inlined_call_operand.vmem [shape: f32[1,128], index: 16, kind: input, shape index: {}]
  %s17 = inlined_call_operand.vmem [shape: bf16[2,16], index: 17, kind: input, shape index: {}]
  %s18 = inlined_call_operand.vmem [shape: bf16[128,128], index: 18, kind: input, shape index: {}]
  %s19 = inlined_call_operand.vmem [shape: f32[1,128], index: 19, kind: input, shape index: {}]
  %s20 = inlined_call_operand.vmem [shape: bf16[128,128], index: 20, kind: input, shape index: {}]
  %s21 = inlined_call_operand.vmem [shape: f32[1,128], index: 21, kind: input, shape index: {}]
  %s22 = inlined_call_operand.hbm [shape: f32[2,128], index: 22, kind: output, shape index: {}]
  %s23 = sld [smem:[#allocation0]]
  $region110: #{mora_for_sequence_classification.1} parent=0
    _
  %s25 = ssub.s32 1, %s23
  %s26 = scalar_select 0, %s25, %s23
  %27 = sst [smem:[#allocation2]] %s7
  $region1: #{mora_for_sequence_classification.1} parent=0
    #allocation3 [shape = 'u8[8192]{0}', space=vmem, size = 0x2000, scoped, tag = 'input window, operand 4, single buffered']
    #allocation4 [shape = 's32[1]{0}', space=sflag, size = 0x4, scoped, tag = 'scoped memory for mora_for_sequence_classification.1']
    #allocation5 [shape = 's32[1]{0}', space=sflag, size = 0x4, scoped, tag = 'scoped memory for mora_for_sequence_classification.1']
    #allocation6 [shape = 'u8[16384]{0}', space=vmem, size = 0x4000, scoped, tag = 'input window, operand 9, single buffered']
    #allocation7 [shape = 's32[1]{0}', space=sflag, size = 0x4, scoped, tag = 'scoped memory for mora_for_sequence_classification.1']
    #allocation8 [shape = 'u8[16384]{0}', space=vmem, size = 0x4000, scoped, tag = 'input window, operand 12, single buffered']
    #allocation9 [shape = 'u8[1024]{0}', space=vmem, size = 0x400, scoped, tag = 'output window, operand 0, single buffered']
    %28 = vsyncpa [#allocation4], 0
    %29 = vsyncpa [#allocation7], 0
    %30 = vsyncpa [#allocation5], 0
    // Predicated region
    $region2: #{mora_for_sequence_classification.1} parent=1 // pred_check
      _
    $region3: #{mora_for_sequence_classification.1} parent=1 // pred_check_branch
      %32 = sbr.rel (0) target = $region5
    $region4: #{mora_for_sequence_classification.1} parent=1 // pred_region
      _
    $region5: #{mora_for_sequence_classification.1} parent=1 // pred_fallthru
      _
    // Predicated region
    $region6: #{mora_for_sequence_classification.1} parent=1 // pred_check
      _
    $region7: #{mora_for_sequence_classification.1} parent=1 // pred_check_branch
      %34 = sbr.rel (0) target = $region9
    $region8: #{mora_for_sequence_classification.1} parent=1 // pred_region
      _
    $region9: #{mora_for_sequence_classification.1} parent=1 // pred_fallthru
      _
    // Predicated region
    $region10: #{mora_for_sequence_classification.1} parent=1 // pred_check
      _
    $region11: #{mora_for_sequence_classification.1} parent=1 // pred_check_branch
      %36 = sbr.rel (0) target = $region13
    $region12: #{mora_for_sequence_classification.1} parent=1 // pred_region
      _
    $region13: #{mora_for_sequence_classification.1} parent=1 // pred_fallthru
      _
    // Predicated region
    $region14: #{mora_for_sequence_classification.1} parent=1 // pred_check
      _
    $region15: #{mora_for_sequence_classification.1} parent=1 // pred_check_branch
      %38 = sbr.rel (0) target = $region17
    $region16: #{mora_for_sequence_classification.1} parent=1 // pred_region
      _
    $region17: #{mora_for_sequence_classification.1} parent=1 // pred_fallthru
      _
    // Predicated region
    $region18: #{mora_for_sequence_classification.1} parent=1 // pred_check
      _
    $region19: #{mora_for_sequence_classification.1} parent=1 // pred_check_branch
      %40 = sbr.rel (0) target = $region21
    $region20: #{mora_for_sequence_classification.1} parent=1 // pred_region
      %42 = vsyncadd [#allocation4], 0
      %s43 = sshll.u32 %s4, 4
      %s44 = int_to_ptr.hbm [resolvable:$true] %s43
      %s45 = sshll.u32 [#allocation3], 4
      %s46 = int_to_ptr.vmem [resolvable:$true] %s45
      %51 = dma.hbm_to_vmem [thread:$0]  %s44, 256, %s46, [#allocation4], 64, 64, 4
    $region21: #{mora_for_sequence_classification.1} parent=1 // pred_fallthru
      _
    // Predicated region
    $region22: #{mora_for_sequence_classification.1} parent=1 // pred_check
      _
    $region23: #{mora_for_sequence_classification.1} parent=1 // pred_check_branch
      %53 = sbr.rel (0) target = $region25
    $region24: #{mora_for_sequence_classification.1} parent=1 // pred_region
      _
    $region25: #{mora_for_sequence_classification.1} parent=1 // pred_fallthru
      _
    // Predicated region
    $region26: #{mora_for_sequence_classification.1} parent=1 // pred_check
      _
    $region27: #{mora_for_sequence_classification.1} parent=1 // pred_check_branch
      %55 = sbr.rel (0) target = $region29
    $region28: #{mora_for_sequence_classification.1} parent=1 // pred_region
      _
    $region29: #{mora_for_sequence_classification.1} parent=1 // pred_fallthru
      _
    // Predicated region
    $region30: #{mora_for_sequence_classification.1} parent=1 // pred_check
      _
    $region31: #{mora_for_sequence_classification.1} parent=1 // pred_check_branch
      %57 = sbr.rel (0) target = $region33
    $region32: #{mora_for_sequence_classification.1} parent=1 // pred_region
      _
    $region33: #{mora_for_sequence_classification.1} parent=1 // pred_fallthru
      _
    // Predicated region
    $region34: #{mora_for_sequence_classification.1} parent=1 // pred_check
      _
    $region35: #{mora_for_sequence_classification.1} parent=1 // pred_check_branch
      %59 = sbr.rel (0) target = $region37
    $region36: #{mora_for_sequence_classification.1} parent=1 // pred_region
      _
    $region37: #{mora_for_sequence_classification.1} parent=1 // pred_fallthru
      _
    // Predicated region
    $region38: #{mora_for_sequence_classification.1} parent=1 // pred_check
      _
    $region39: #{mora_for_sequence_classification.1} parent=1 // pred_check_branch
      %61 = sbr.rel (0) target = $region41
    $region40: #{mora_for_sequence_classification.1} parent=1 // pred_region
      %63 = vsyncadd [#allocation7], 0
      %s64 = sshll.u32 %s9, 4
      %s65 = int_to_ptr.hbm [resolvable:$true] %s64
      %s66 = sshll.u32 [#allocation6], 4
      %s67 = int_to_ptr.vmem [resolvable:$true] %s66
      %72 = dma.hbm_to_vmem [thread:$0]  %s65, 512, %s67, [#allocation7], 128, 128, 8
    $region41: #{mora_for_sequence_classification.1} parent=1 // pred_fallthru
      _
    // Predicated region
    $region42: #{mora_for_sequence_classification.1} parent=1 // pred_check
      _
    $region43: #{mora_for_sequence_classification.1} parent=1 // pred_check_branch
      %74 = sbr.rel (0) target = $region45
    $region44: #{mora_for_sequence_classification.1} parent=1 // pred_region
      _
    $region45: #{mora_for_sequence_classification.1} parent=1 // pred_fallthru
      _
    // Predicated region
    $region46: #{mora_for_sequence_classification.1} parent=1 // pred_check
      _
    $region47: #{mora_for_sequence_classification.1} parent=1 // pred_check_branch
      %76 = sbr.rel (0) target = $region49
    $region48: #{mora_for_sequence_classification.1} parent=1 // pred_region
      _
    $region49: #{mora_for_sequence_classification.1} parent=1 // pred_fallthru
      _
    // Predicated region
    $region50: #{mora_for_sequence_classification.1} parent=1 // pred_check
      _
    $region51: #{mora_for_sequence_classification.1} parent=1 // pred_check_branch
      %78 = sbr.rel (0) target = $region53
    $region52: #{mora_for_sequence_classification.1} parent=1 // pred_region
      %80 = vsyncadd [#allocation7], 0
      %s81 = sshll.u32 %s12, 4
      %s82 = int_to_ptr.hbm [resolvable:$true] %s81
      %s83 = sshll.u32 [#allocation8], 4
      %s84 = int_to_ptr.vmem [resolvable:$true] %s83
      %89 = dma.hbm_to_vmem [thread:$0]  %s82, 512, %s84, [#allocation7], 128, 128, 8
    $region53: #{mora_for_sequence_classification.1} parent=1 // pred_fallthru
      _
    // Predicated region
    $region54: #{mora_for_sequence_classification.1} parent=1 // pred_check
      _
    $region55: #{mora_for_sequence_classification.1} parent=1 // pred_check_branch
      %91 = sbr.rel (0) target = $region57
    $region56: #{mora_for_sequence_classification.1} parent=1 // pred_region
      _
    $region57: #{mora_for_sequence_classification.1} parent=1 // pred_fallthru
      _
    // Predicated region
    $region58: #{mora_for_sequence_classification.1} parent=1 // pred_check
      _
    $region59: #{mora_for_sequence_classification.1} parent=1 // pred_check_branch
      %93 = sbr.rel (0) target = $region61
    $region60: #{mora_for_sequence_classification.1} parent=1 // pred_region
      _
    $region61: #{mora_for_sequence_classification.1} parent=1 // pred_fallthru
      _
    // Predicated region
    $region62: #{mora_for_sequence_classification.1} parent=1 // pred_check
      _
    $region63: #{mora_for_sequence_classification.1} parent=1 // pred_check_branch
      %95 = sbr.rel (0) target = $region65
    $region64: #{mora_for_sequence_classification.1} parent=1 // pred_region
      _
    $region65: #{mora_for_sequence_classification.1} parent=1 // pred_fallthru
      _
    // Predicated region
    $region66: #{mora_for_sequence_classification.1} parent=1 // pred_check
      _
    $region67: #{mora_for_sequence_classification.1} parent=1 // pred_check_branch
      %97 = sbr.rel (0) target = $region69
    $region68: #{mora_for_sequence_classification.1} parent=1 // pred_region
      _
    $region69: #{mora_for_sequence_classification.1} parent=1 // pred_fallthru
      _
    // Predicated region
    $region70: #{mora_for_sequence_classification.1} parent=1 // pred_check
      _
    $region71: #{mora_for_sequence_classification.1} parent=1 // pred_check_branch
      %99 = sbr.rel (0) target = $region73
    $region72: #{mora_for_sequence_classification.1} parent=1 // pred_region
      _
    $region73: #{mora_for_sequence_classification.1} parent=1 // pred_fallthru
      _
    // Predicated region
    $region74: #{mora_for_sequence_classification.1} parent=1 // pred_check
      _
    $region75: #{mora_for_sequence_classification.1} parent=1 // pred_check_branch
      %101 = sbr.rel (0) target = $region77
    $region76: #{mora_for_sequence_classification.1} parent=1 // pred_region
      _
    $region77: #{mora_for_sequence_classification.1} parent=1 // pred_fallthru
      _
    // Predicated region
    $region78: #{mora_for_sequence_classification.1} parent=1 // pred_check
      _
    $region79: #{mora_for_sequence_classification.1} parent=1 // pred_check_branch
      %103 = sbr.rel (0) target = $region81
    $region80: #{mora_for_sequence_classification.1} parent=1 // pred_region
      _
    $region81: #{mora_for_sequence_classification.1} parent=1 // pred_fallthru
      _
    // Predicated region
    $region82: #{mora_for_sequence_classification.1} parent=1 // pred_check
      _
    $region83: #{mora_for_sequence_classification.1} parent=1 // pred_check_branch
      %105 = sbr.rel (0) target = $region85
    $region84: #{mora_for_sequence_classification.1} parent=1 // pred_region
      _
    $region85: #{mora_for_sequence_classification.1} parent=1 // pred_fallthru
      _
    // Predicated region
    $region86: #{mora_for_sequence_classification.1} parent=1 // pred_check
      _
    $region87: #{mora_for_sequence_classification.1} parent=1 // pred_check_branch
      %107 = sbr.rel (0) target = $region89
    $region88: #{mora_for_sequence_classification.1} parent=1 // pred_region
      _
    $region89: #{mora_for_sequence_classification.1} parent=1 // pred_fallthru
      _
    // Predicated region
    $region90: #{mora_for_sequence_classification.1} parent=1 // pred_check
      _
    $region91: #{mora_for_sequence_classification.1} parent=1 // pred_check_branch
      %109 = sbr.rel (0) target = $region93
    $region92: #{mora_for_sequence_classification.1} parent=1 // pred_region
      %111 = dma.done [#allocation4], 256
    $region93: #{mora_for_sequence_classification.1} parent=1 // pred_fallthru
      _
    // Predicated region
    $region94: #{mora_for_sequence_classification.1} parent=1 // pred_check
      _
    $region95: #{mora_for_sequence_classification.1} parent=1 // pred_check_branch
      %113 = sbr.rel (0) target = $region97
    $region96: #{mora_for_sequence_classification.1} parent=1 // pred_region
      %115 = dma.done [#allocation7], 512
    $region97: #{mora_for_sequence_classification.1} parent=1 // pred_fallthru
      _
    // Predicated region
    $region98: #{mora_for_sequence_classification.1} parent=1 // pred_check
      _
    $region99: #{mora_for_sequence_classification.1} parent=1 // pred_check_branch
      %117 = sbr.rel (0) target = $region101
    $region100: #{mora_for_sequence_classification.1} parent=1 // pred_region
      %119 = dma.done [#allocation7], 512
    $region101: #{mora_for_sequence_classification.1} parent=1 // pred_fallthru
      _
    %v121 = vld [vmem:[%s0] sm:$0xf]
    %v122 = vld [vmem:[%s0 + $0x4] sm:$0xf]
    %v123 = vld [vmem:[%s1] sm:$0xf]
    %v124 = vld [vmem:[%s1 + $0x4] sm:$0xf]
    %v125 = vld [vmem:[%s1 + $0x8] sm:$0xf]
    %v126 = vld [vmem:[%s1 + $0xc] sm:$0xf]
    %v127 = vld [vmem:[%s2] sm:$0x1]
    %v129 = vperm.slane %v127, 0
    %v133 = vunpack.c.l.b16 %v121
    %v134 = vunpack.c.l.b16 %v122
    %v135 = vpack.c.b16 %v134, %v133
    %v140 = vunpack.c.l.b16 %v123
    %v141 = vunpack.c.l.b16 %v124
    %v142 = vunpack.c.l.b16 %v125
    %v143 = vunpack.c.l.b16 %v126
    %v144 = vpack.c.b16 %v141, %v140
    %v145 = vpack.c.b16 %v143, %v142
    %vm148 = vcmask 261120
    %v150 = vsel %vm148, %v135, 0
    %152 = vmatpush.bf16.msra.mxu0 0
    %153 = vmatpush.bf16.msra.mxu0 0
    %154 = vmatpush.bf16.msra.mxu0 0
    %155 = vmatpush.bf16.msra.mxu0 0
    %156 = vmatpush.bf16.msra.mxu0 0
    %157 = vmatpush.bf16.msra.mxu0 0
    %158 = vmatpush.bf16.msra.mxu0 %v145
    %159 = vmatpush.bf16.msra.mxu0 %v144
    %160 = vmatmul.bf16.gmra.mxu0 %v150
    %v161 = vpop.f32.mrf.mxu0
    %v162 = vadd.f32 %v129, %v161
    %v163 = vpop.f32.mrf.mxu0
    %v164 = vadd.f32 %v129, %v163
    %165 = vdwg.mxu0
    %v166 = vld [vmem:[%s3] sm:$0xf]
    %v167 = vld [vmem:[%s3 + $0x4] sm:$0xf]
    %v168 = vld [vmem:[%s3 + $0x8] sm:$0xf]
    %v169 = vld [vmem:[%s3 + $0xc] sm:$0xf]
    %v170 = vld [vmem:[%s5] sm:$0x1]
    %v172 = vperm.slane %v170, 0
    %v178 = vunpack.c.l.b16 %v166
    %v179 = vunpack.c.l.b16 %v167
    %v180 = vunpack.c.l.b16 %v168
    %v181 = vunpack.c.l.b16 %v169
    %v182 = vpack.c.b16 %v179, %v178
    %v183 = vpack.c.b16 %v181, %v180
    %186 = vmatpush.bf16.msra.mxu0 0
    %187 = vmatpush.bf16.msra.mxu0 0
    %188 = vmatpush.bf16.msra.mxu0 0
    %189 = vmatpush.bf16.msra.mxu0 0
    %190 = vmatpush.bf16.msra.mxu0 0
    %191 = vmatpush.bf16.msra.mxu0 0
    %192 = vmatpush.bf16.msra.mxu0 %v183
    %193 = vmatpush.bf16.msra.mxu0 %v182
    %194 = vmatmul.bf16.gmra.mxu0 %v150
    %v195 = vpop.f32.mrf.mxu0
    %v196 = vadd.f32 %v172, %v195
    %v197 = vpop.f32.mrf.mxu0
    %v198 = vadd.f32 %v172, %v197
    %199 = vdwg.mxu0
    %v200 = vld [vmem:[#allocation3] sm:$0xf]
    %v201 = vld [vmem:[#allocation3 + $0x4] sm:$0xf]
    %v202 = vld [vmem:[#allocation3 + $0x8] sm:$0xf]
    %v203 = vld [vmem:[#allocation3 + $0xc] sm:$0xf]
    %v204 = vld [vmem:[%s6] sm:$0x1]
    %s205 = sld [smem:[#allocation2]]
    %vm206 = vcmp.le.f32.partialorder 0.0, 0.99
    %v207 = vsel %vm206, 1, 0
    %v208 = vcvt.s32.f32 %v207
    %v213 = vunpack.c.l.b16 %v200
    %v214 = vunpack.c.l.b16 %v201
    %v215 = vunpack.c.l.b16 %v202
    %v216 = vunpack.c.l.b16 %v203
    %v217 = vpack.c.b16 %v214, %v213
    %v218 = vpack.c.b16 %v216, %v215
    %v222 = vsel %vm148, 0, 0
    %224 = vmatpush.bf16.msra.mxu0 0
    %225 = vmatpush.bf16.msra.mxu0 0
    %226 = vmatpush.bf16.msra.mxu0 0
    %227 = vmatpush.bf16.msra.mxu0 0
    %228 = vmatpush.bf16.msra.mxu0 0
    %229 = vmatpush.bf16.msra.mxu0 0
    %230 = vmatpush.bf16.msra.mxu0 %v218
    %231 = vmatpush.bf16.msra.mxu0 %v217
    %232 = vmatmul.bf16.gmra.mxu0 %v222
    %v233 = vpop.f32.mrf.mxu0
    %v234 = vadd.f32 0.0, %v233
    %v235 = vpop.f32.mrf.mxu0
    %v236 = vadd.f32 0.0, %v235
    %237 = vdwg.mxu0
    %v238 = vadd.f32 %v196, %v234
    %v239 = vadd.f32 %v198, %v236
    %v240 = vxor.u32 %v238, 2147483648
    %v241 = vxor.u32 %v239, 2147483648
    %v242 = vmul.f32 %v240, 1.442695
    %v243 = vpow.pop %v242
    %v244 = vmul.f32 %v241, 1.442695
    %v245 = vpow.pop %v244
    %v246 = vadd.f32 %v243, 1.0
    %v247 = vadd.f32 %v245, 1.0
    %v248 = vrcp.pop %v246
    %v249 = vmul.f32 %v246, %v248
    %v250 = vsub.f32 1.0, %v249
    %v251 = vmul.f32 %v248, %v250
    %v252 = vadd.f32 %v248, %v251
    %vm253 = vweird.f32 %v246
    %vm254 = vweird.f32 %v248
    %vm255 = vmor %vm253, %vm254
    %v256 = vsel %vm255, %v248, %v252
    %v257 = vand.u32 2147483647, %v246
    %vm258 = vcmp.eq.f32.partialorder %v257, 8.507059e+37
    %v259 = vand.u32 %v246, 2147483648
    %v260 = vor.u32 1.1754944e-38, %v259
    %v261 = vsel %vm258, %v260, %v256
    %v262 = vmul.f32 1.0, %v261
    %v263 = vrcp.pop %v247
    %v264 = vmul.f32 %v247, %v263
    %v265 = vsub.f32 1.0, %v264
    %v266 = vmul.f32 %v263, %v265
    %v267 = vadd.f32 %v263, %v266
    %vm268 = vweird.f32 %v247
    %vm269 = vweird.f32 %v263
    %vm270 = vmor %vm268, %vm269
    %v271 = vsel %vm270, %v263, %v267
    %v272 = vand.u32 2147483647, %v247
    %vm273 = vcmp.eq.f32.partialorder %v272, 8.507059e+37
    %v274 = vand.u32 %v247, 2147483648
    %v275 = vor.u32 1.1754944e-38, %v274
    %v276 = vsel %vm273, %v275, %v271
    %v277 = vmul.f32 1.0, %v276
    %v278 = vtanh.pop %v238
    %v279 = vtanh.pop %v239
    %v280 = vmul.f32 %v262, 0.0
    %v281 = vmul.f32 %v277, 0.0
    %284 = vrot.lane.b32.xlu0 %v278, 64
    %v285 = vpop.permute.xlu0 %284
    %286 = vrot.lane.b32.xlu0 %v279, 64
    %v287 = vpop.permute.xlu0 %286
    %v290 = vmul.f32 %v262, %v285
    %v291 = vmul.f32 %v277, %v287
    %294 = vrot.lane.b32.xlu0 %v290, 32
    %v295 = vpop.permute.xlu0 %294
    %296 = vrot.lane.b32.xlu0 %v291, 32
    %v297 = vpop.permute.xlu0 %296
    %v300 = vadd.f32 %v280, %v295
    %v301 = vadd.f32 %v281, %v297
    %v302 = vtanh.pop %v300
    %v303 = vtanh.pop %v301
    %306 = vrot.lane.b32.xlu0 %v302, 64
    %v307 = vpop.permute.xlu0 %306
    %308 = vrot.lane.b32.xlu0 %v303, 64
    %v309 = vpop.permute.xlu0 %308
    %v312 = vmul.f32 %v262, %v307
    %v313 = vmul.f32 %v277, %v309
    %v315 = vperm.slane %v204, 0
    %316 = vrot.lane.b32.xlu0 %v315, 96
    %v317 = vpop.permute.xlu0 %316
    %v319 = vmul.f32 %v312, %v317
    %v320 = vmul.f32 %v313, %v317
    %323 = vrot.lane.b32.xlu0 %v319, 32
    %v324 = vpop.permute.xlu0 %323
    %325 = vrot.lane.b32.xlu0 %v320, 32
    %v326 = vpop.permute.xlu0 %325
    %v329 = vsel %vm148, %v324, 0.0
    %330 = vadd.xlane.f32.xlu0 %v329
    %v331 = vpop.xlane.xlu0 %330
    %v332 = vsel %vm148, %v326, 0.0
    %333 = vadd.xlane.f32.xlu0 %v332
    %v334 = vpop.xlane.xlu0 %333
    %v335 = vstv %s205
    %v336 = vadd.f32 %v331, %v335
    %v337 = vadd.f32 %v334, %v335
    %v338 = vxor.u32 %v336, 2147483648
    %v339 = vxor.u32 %v337, 2147483648
    %v340 = vmul.f32 %v338, 1.442695
    %v341 = vpow.pop %v340
    %v342 = vmul.f32 %v339, 1.442695
    %v343 = vpow.pop %v342
    %v344 = vadd.f32 %v341, 1.0
    %v345 = vadd.f32 %v343, 1.0
    %v346 = vrcp.pop %v344
    %v347 = vmul.f32 %v344, %v346
    %v348 = vsub.f32 1.0, %v347
    %v349 = vmul.f32 %v346, %v348
    %v350 = vadd.f32 %v346, %v349
    %vm351 = vweird.f32 %v344
    %vm352 = vweird.f32 %v346
    %vm353 = vmor %vm351, %vm352
    %v354 = vsel %vm353, %v346, %v350
    %v355 = vand.u32 2147483647, %v344
    %vm356 = vcmp.eq.f32.partialorder %v355, 8.507059e+37
    %v357 = vand.u32 %v344, 2147483648
    %v358 = vor.u32 1.1754944e-38, %v357
    %v359 = vsel %vm356, %v358, %v354
    %v360 = vmul.f32 1.0, %v359
    %v361 = vrcp.pop %v345
    %v362 = vmul.f32 %v345, %v361
    %v363 = vsub.f32 1.0, %v362
    %v364 = vmul.f32 %v361, %v363
    %v365 = vadd.f32 %v361, %v364
    %vm366 = vweird.f32 %v345
    %vm367 = vweird.f32 %v361
    %vm368 = vmor %vm366, %vm367
    %v369 = vsel %vm368, %v361, %v365
    %v370 = vand.u32 2147483647, %v345
    %vm371 = vcmp.eq.f32.partialorder %v370, 8.507059e+37
    %v372 = vand.u32 %v345, 2147483648
    %v373 = vor.u32 1.1754944e-38, %v372
    %v374 = vsel %vm371, %v373, %v369
    %v375 = vmul.f32 1.0, %v374
    %v376 = vmul.f32 %v208, %v312
    %v377 = vmul.f32 %v208, %v313
    %v378 = vadd.f32 %v376, 0.0
    %v379 = vadd.f32 %v377, 0.0
    %v380 = vmul.f32 %v208, %v300
    %v381 = vmul.f32 %v208, %v301
    %v382 = vadd.f32 %v380, 0.0
    %v383 = vadd.f32 %v381, 0.0
    %v384 = vadd.f32 %v360, 0.0
    %v385 = vadd.f32 %v375, 0.0
    %v386 = vmul.f32 %v208, %v384
    %v387 = vmul.f32 %v208, %v385
    %v388 = vadd.f32 %v386, 0.0
    %v389 = vadd.f32 %v387, 0.0
    %v390 = vsub.f32 1.0, %v388
    %v391 = vsub.f32 1.0, %v389
    %v392 = vmul.f32 %v208, %v390
    %v393 = vmul.f32 %v208, %v391
    %v394 = vadd.f32 %v392, 0.0
    %v395 = vadd.f32 %v393, 0.0
    %v396 = vadd.f32 %v208, 0.0
    %v397 = vmin.f32 %v388, %v389
    %v398 = vrot.slane %v397, 4
    %v399 = vmin.f32 %v397, %v398
    %v400 = vrot.slane %v399, 2
    %v401 = vmin.f32 %v399, %v400
    %v402 = vrot.slane %v401, 1
    %v403 = vmin.f32 %v401, %v402
    %vm404 = vcmp.le.f32.partialorder %v403, 0.99
    %v405 = vsel %vm404, 1, 0
    %v406 = vcvt.s32.f32 %v405
    %v407 = vmul.f32 %v208, %v406
    %v408 = vpack.c.bf16 %v379, %v378
    %410 = vrot.lane.b32.xlu0 %v408, 32
    %v411 = vpop.permute.xlu0 %410
    %v413 = vsel %vm148, %v411, 0
    %415 = vmatpush.bf16.msra.mxu0 0
    %416 = vmatpush.bf16.msra.mxu0 0
    %417 = vmatpush.bf16.msra.mxu0 0
    %418 = vmatpush.bf16.msra.mxu0 0
    %419 = vmatpush.bf16.msra.mxu0 0
    %420 = vmatpush.bf16.msra.mxu0 0
    %421 = vmatpush.bf16.msra.mxu0 %v218
    %422 = vmatpush.bf16.msra.mxu0 %v217
    %423 = vmatmul.bf16.gmra.mxu0 %v413
    %v424 = vpop.f32.mrf.mxu0
    %v425 = vadd.f32 0.0, %v424
    %v426 = vpop.f32.mrf.mxu0
    %v427 = vadd.f32 0.0, %v426
    %428 = vdwg.mxu0
    %v429 = vadd.f32 %v196, %v425
    %v430 = vadd.f32 %v198, %v427
    %v431 = vxor.u32 %v429, 2147483648
    %v432 = vxor.u32 %v430, 2147483648
    %v433 = vmul.f32 %v431, 1.442695
    %v434 = vpow.pop %v433
    %v435 = vmul.f32 %v432, 1.442695
    %v436 = vpow.pop %v435
    %v437 = vadd.f32 %v434, 1.0
    %v438 = vadd.f32 %v436, 1.0
    %v439 = vrcp.pop %v437
    %v440 = vmul.f32 %v437, %v439
    %v441 = vsub.f32 1.0, %v440
    %v442 = vmul.f32 %v439, %v441
    %v443 = vadd.f32 %v439, %v442
    %vm444 = vweird.f32 %v437
    %vm445 = vweird.f32 %v439
    %vm446 = vmor %vm444, %vm445
    %v447 = vsel %vm446, %v439, %v443
    %v448 = vand.u32 2147483647, %v437
    %vm449 = vcmp.eq.f32.partialorder %v448, 8.507059e+37
    %v450 = vand.u32 %v437, 2147483648
    %v451 = vor.u32 1.1754944e-38, %v450
    %v452 = vsel %vm449, %v451, %v447
    %v453 = vmul.f32 1.0, %v452
    %v454 = vrcp.pop %v438
    %v455 = vmul.f32 %v438, %v454
    %v456 = vsub.f32 1.0, %v455
    %v457 = vmul.f32 %v454, %v456
    %v458 = vadd.f32 %v454, %v457
    %vm459 = vweird.f32 %v438
    %vm460 = vweird.f32 %v454
    %vm461 = vmor %vm459, %vm460
    %v462 = vsel %vm461, %v454, %v458
    %v463 = vand.u32 2147483647, %v438
    %vm464 = vcmp.eq.f32.partialorder %v463, 8.507059e+37
    %v465 = vand.u32 %v438, 2147483648
    %v466 = vor.u32 1.1754944e-38, %v465
    %v467 = vsel %vm464, %v466, %v462
    %v468 = vmul.f32 1.0, %v467
    %v469 = vtanh.pop %v429
    %v470 = vtanh.pop %v430
    %v471 = vmul.f32 %v453, %v382
    %v472 = vmul.f32 %v468, %v383
    %475 = vrot.lane.b32.xlu0 %v469, 64
    %v476 = vpop.permute.xlu0 %475
    %477 = vrot.lane.b32.xlu0 %v470, 64
    %v478 = vpop.permute.xlu0 %477
    %v481 = vmul.f32 %v453, %v476
    %v482 = vmul.f32 %v468, %v478
    %485 = vrot.lane.b32.xlu0 %v481, 32
    %v486 = vpop.permute.xlu0 %485
    %487 = vrot.lane.b32.xlu0 %v482, 32
    %v488 = vpop.permute.xlu0 %487
    %v491 = vadd.f32 %v471, %v486
    %v492 = vadd.f32 %v472, %v488
    %v493 = vtanh.pop %v491
    %v494 = vtanh.pop %v492
    %497 = vrot.lane.b32.xlu0 %v493, 64
    %v498 = vpop.permute.xlu0 %497
    %499 = vrot.lane.b32.xlu0 %v494, 64
    %v500 = vpop.permute.xlu0 %499
    %v503 = vmul.f32 %v453, %v498
    %v504 = vmul.f32 %v468, %v500
    %v505 = vmul.f32 %v503, %v317
    %v506 = vmul.f32 %v504, %v317
    %509 = vrot.lane.b32.xlu0 %v505, 32
    %v510 = vpop.permute.xlu0 %509
    %511 = vrot.lane.b32.xlu0 %v506, 32
    %v512 = vpop.permute.xlu0 %511
    %v515 = vsel %vm148, %v510, 0.0
    %516 = vadd.xlane.f32.xlu0 %v515
    %v517 = vpop.xlane.xlu0 %516
    %v518 = vsel %vm148, %v512, 0.0
    %519 = vadd.xlane.f32.xlu0 %v518
    %v520 = vpop.xlane.xlu0 %519
    %v521 = vadd.f32 %v517, %v335
    %v522 = vadd.f32 %v520, %v335
    %v523 = vxor.u32 %v521, 2147483648
    %v524 = vxor.u32 %v522, 2147483648
    %v525 = vmul.f32 %v523, 1.442695
    %v526 = vpow.pop %v525
    %v527 = vmul.f32 %v524, 1.442695
    %v528 = vpow.pop %v527
    %v529 = vadd.f32 %v526, 1.0
    %v530 = vadd.f32 %v528, 1.0
    %v531 = vrcp.pop %v529
    %v532 = vmul.f32 %v529, %v531
    %v533 = vsub.f32 1.0, %v532
    %v534 = vmul.f32 %v531, %v533
    %v535 = vadd.f32 %v531, %v534
    %vm536 = vweird.f32 %v529
    %vm537 = vweird.f32 %v531
    %vm538 = vmor %vm536, %vm537
    %v539 = vsel %vm538, %v531, %v535
    %v540 = vand.u32 2147483647, %v529
    %vm541 = vcmp.eq.f32.partialorder %v540, 8.507059e+37
    %v542 = vand.u32 %v529, 2147483648
    %v543 = vor.u32 1.1754944e-38, %v542
    %v544 = vsel %vm541, %v543, %v539
    %v545 = vmul.f32 1.0, %v544
    %v546 = vrcp.pop %v530
    %v547 = vmul.f32 %v530, %v546
    %v548 = vsub.f32 1.0, %v547
    %v549 = vmul.f32 %v546, %v548
    %v550 = vadd.f32 %v546, %v549
    %vm551 = vweird.f32 %v530
    %vm552 = vweird.f32 %v546
    %vm553 = vmor %vm551, %vm552
    %v554 = vsel %vm553, %v546, %v550
    %v555 = vand.u32 2147483647, %v530
    %vm556 = vcmp.eq.f32.partialorder %v555, 8.507059e+37
    %v557 = vand.u32 %v530, 2147483648
    %v558 = vor.u32 1.1754944e-38, %v557
    %v559 = vsel %vm556, %v558, %v554
    %v560 = vmul.f32 1.0, %v559
    %v561 = vmul.f32 %v545, %v390
    %v562 = vmul.f32 %v560, %v391
    %v563 = vadd.f32 %v388, %v561
    %v564 = vadd.f32 %v389, %v562
    %v565 = vsub.f32 %v563, %v388
    %v566 = vsub.f32 %v564, %v389
    %v567 = vmul.f32 %v407, %v565
    %v568 = vmul.f32 %v407, %v566
    %v569 = vadd.f32 %v388, %v567
    %v570 = vadd.f32 %v389, %v568
    %v571 = vsub.f32 1.0, %v569
    %v572 = vsub.f32 1.0, %v570
    %v573 = vmul.f32 %v407, %v571
    %v574 = vmul.f32 %v407, %v572
    %v575 = vadd.f32 %v394, %v573
    %v576 = vadd.f32 %v395, %v574
    %v577 = vadd.f32 %v396, %v407
    %v578 = vmul.f32 %v407, %v503
    %v579 = vmul.f32 %v407, %v504
    %v580 = vadd.f32 %v378, %v578
    %v581 = vadd.f32 %v379, %v579
    %v582 = vrcp.pop %v577
    %v583 = vmul.f32 %v577, %v582
    %v584 = vsub.f32 1.0, %v583
    %v585 = vmul.f32 %v582, %v584
    %v586 = vadd.f32 %v582, %v585
    %vm587 = vweird.f32 %v577
    %vm588 = vweird.f32 %v582
    %vm589 = vmor %vm587, %vm588
    %v590 = vsel %vm589, %v582, %v586
    %v591 = vand.u32 2147483647, %v577
    %vm592 = vcmp.eq.f32.partialorder %v591, 8.507059e+37
    %v593 = vand.u32 %v577, 2147483648
    %v594 = vor.u32 1.1754944e-38, %v593
    %v595 = vsel %vm592, %v594, %v590
    %v596 = vmul.f32 %v575, %v595
    %v597 = vmul.f32 %v576, %v595
    %v598 = vmul.f32 %v580, %v596
    %v599 = vmul.f32 %v581, %v597
    %v600 = vld [vmem:[%s8] sm:$0x3]
    %v601 = vpack.c.bf16 %v599, %v598
    %v602 = vld [vmem:[#allocation6] sm:$0xff]
    %v603 = vld [vmem:[#allocation6 + $0x8] sm:$0xff]
    %v604 = vld [vmem:[#allocation6 + $0x10] sm:$0xff]
    %v605 = vld [vmem:[#allocation6 + $0x18] sm:$0xff]
    %v606 = vld [vmem:[%s10] sm:$0x3]
    %v608 = vperm.slane %v606, 0
    %v609 = vperm.slane %v606, 1
    %613 = vrot.lane.b32.xlu0 %v601, 32
    %v614 = vpop.permute.xlu0 %613
    %v619 = vunpack.c.l.b16 %v602
    %v620 = vunpack.c.h.b16 %v602
    %v621 = vunpack.c.l.b16 %v603
    %v622 = vunpack.c.h.b16 %v603
    %v623 = vunpack.c.l.b16 %v604
    %v624 = vunpack.c.h.b16 %v604
    %v625 = vunpack.c.l.b16 %v605
    %v626 = vunpack.c.h.b16 %v605
    %v627 = vpack.c.b16 %v621, %v619
    %v628 = vpack.c.b16 %v622, %v620
    %v629 = vpack.c.b16 %v625, %v623
    %v630 = vpack.c.b16 %v626, %v624
    %v636 = vsel %vm148, %v614, 0
    %638 = vmatpush.bf16.msra.mxu0 0
    %639 = vmatpush.bf16.msra.mxu0 0
    %640 = vmatpush.bf16.msra.mxu0 0
    %641 = vmatpush.bf16.msra.mxu0 0
    %642 = vmatpush.bf16.msra.mxu0 0
    %643 = vmatpush.bf16.msra.mxu0 0
    %644 = vmatpush.bf16.msra.mxu0 %v629
    %645 = vmatpush.bf16.msra.mxu0 %v627
    %646 = vmatmul.bf16.gmra.mxu0 %v636
    %v647 = vpop.f32.mrf.mxu0
    %v648 = vadd.f32 %v608, %v647
    %v649 = vpop.f32.mrf.mxu0
    %v650 = vadd.f32 %v608, %v649
    %651 = vdwg.mxu0
    %652 = vmatpush.bf16.msra.mxu0 0
    %653 = vmatpush.bf16.msra.mxu0 0
    %654 = vmatpush.bf16.msra.mxu0 0
    %655 = vmatpush.bf16.msra.mxu0 0
    %656 = vmatpush.bf16.msra.mxu0 0
    %657 = vmatpush.bf16.msra.mxu0 0
    %658 = vmatpush.bf16.msra.mxu0 %v630
    %659 = vmatpush.bf16.msra.mxu0 %v628
    %660 = vmatmul.bf16.gmra.mxu0 %v636
    %v661 = vpop.f32.mrf.mxu0
    %v662 = vadd.f32 %v609, %v661
    %v663 = vpop.f32.mrf.mxu0
    %v664 = vadd.f32 %v609, %v663
    %665 = vdwg.mxu0
    %v666 = vmax.f32 %v648, 0.0
    %v667 = vmax.f32 %v650, 0.0
    %v668 = vlaneseq
    %v669 = vand.u32 %v668, 127
    %vm670 = vcmask 31744
    %v671 = vsel %vm670, %v662, -inf
    %672 = vmax.xlane.f32.xlu0 %v671
    %v673 = vpop.xlane.xlu0 %672
    %v674 = vsel %vm670, %v664, -inf
    %675 = vmax.xlane.f32.xlu0 %v674
    %v676 = vpop.xlane.xlu0 %675
    %vm677 = vcmp.ge.f32.partialorder %v662, %v673
    %vm678 = vcmp.ge.f32.partialorder %v664, %v676
    %v679 = vsel %vm677, %v669, 4
    %v680 = vsel %vm678, %v669, 4
    %v681 = vsel %vm670, %v679, 2147483647
    %v682 = vand.u32 %v681, 65535
    %v683 = vshra.s32 %v681, 16
    %v684 = vcvt.s32.f32 %v682
    %v685 = vcvt.s32.f32 %v683
    %686 = vmin.xlane.f32.xlu0 %v685
    %v687 = vpop.xlane.xlu0 %686
    %vm688 = vcmp.eq.f32.partialorder %v685, %v687
    %v689 = vsel %vm688, %v684, inf
    %690 = vmin.xlane.f32.xlu0 %v689
    %v691 = vpop.xlane.xlu0 %690
    %v692 = vcvt.f32.s32 %v691
    %v693 = vcvt.f32.s32 %v687
    %v694 = vshll.u32 %v693, 16
    %v695 = vadd.s32 %v694, %v692
    %v696 = vsel %vm670, %v680, 2147483647
    %v697 = vand.u32 %v696, 65535
    %v698 = vshra.s32 %v696, 16
    %v699 = vcvt.s32.f32 %v697
    %v700 = vcvt.s32.f32 %v698
    %701 = vmin.xlane.f32.xlu0 %v700
    %v702 = vpop.xlane.xlu0 %701
    %vm703 = vcmp.eq.f32.partialorder %v700, %v702
    %v704 = vsel %vm703, %v699, inf
    %705 = vmin.xlane.f32.xlu0 %v704
    %v706 = vpop.xlane.xlu0 %705
    %v707 = vcvt.f32.s32 %v706
    %v708 = vcvt.f32.s32 %v702
    %v709 = vshll.u32 %v708, 16
    %v710 = vadd.s32 %v709, %v707
    %vm711 = vcmp.eq.s32.totalorder %v669, %v695
    %vm712 = vcmp.eq.s32.totalorder %v669, %v710
    %v713 = vsel %vm711, -1e+30, %v662
    %v714 = vsel %vm712, -1e+30, %v664
    %v715 = vsel %vm670, %v713, -inf
    %716 = vmax.xlane.f32.xlu0 %v715
    %v717 = vpop.xlane.xlu0 %716
    %v718 = vsel %vm670, %v714, -inf
    %719 = vmax.xlane.f32.xlu0 %v718
    %v720 = vpop.xlane.xlu0 %719
    %vm721 = vcmp.ge.f32.partialorder %v713, %v717
    %vm722 = vcmp.ge.f32.partialorder %v714, %v720
    %v723 = vsel %vm721, %v669, 4
    %v724 = vsel %vm722, %v669, 4
    %v725 = vsel %vm670, %v723, 2147483647
    %v726 = vand.u32 %v725, 65535
    %v727 = vshra.s32 %v725, 16
    %v728 = vcvt.s32.f32 %v726
    %v729 = vcvt.s32.f32 %v727
    %730 = vmin.xlane.f32.xlu0 %v729
    %v731 = vpop.xlane.xlu0 %730
    %vm732 = vcmp.eq.f32.partialorder %v729, %v731
    %v733 = vsel %vm732, %v728, inf
    %734 = vmin.xlane.f32.xlu0 %v733
    %v735 = vpop.xlane.xlu0 %734
    %v736 = vcvt.f32.s32 %v735
    %v737 = vcvt.f32.s32 %v731
    %v738 = vshll.u32 %v737, 16
    %v739 = vadd.s32 %v738, %v736
    %v740 = vsel %vm670, %v724, 2147483647
    %v741 = vand.u32 %v740, 65535
    %v742 = vshra.s32 %v740, 16
    %v743 = vcvt.s32.f32 %v741
    %v744 = vcvt.s32.f32 %v742
    %745 = vmin.xlane.f32.xlu0 %v744
    %v746 = vpop.xlane.xlu0 %745
    %vm747 = vcmp.eq.f32.partialorder %v744, %v746
    %v748 = vsel %vm747, %v743, inf
    %749 = vmin.xlane.f32.xlu0 %v748
    %v750 = vpop.xlane.xlu0 %749
    %v751 = vcvt.f32.s32 %v750
    %v752 = vcvt.f32.s32 %v746
    %v753 = vshll.u32 %v752, 16
    %v754 = vadd.s32 %v753, %v751
    %vm755 = vcmp.eq.s32.totalorder %v669, %v739
    %vm756 = vcmp.eq.s32.totalorder %v669, %v754
    %v757 = vsub.f32 %v717, %v673
    %v758 = vsub.f32 %v720, %v676
    %v759 = vmul.f32 %v757, 1.442695
    %v760 = vpow.pop %v759
    %v761 = vmul.f32 %v758, 1.442695
    %v762 = vpow.pop %v761
    %v763 = vadd.f32 %v760, 1.0
    %v764 = vadd.f32 %v762, 1.0
    %v765 = vrcp.pop %v763
    %v766 = vmul.f32 %v763, %v765
    %v767 = vsub.f32 1.0, %v766
    %v768 = vmul.f32 %v765, %v767
    %v769 = vadd.f32 %v765, %v768
    %vm770 = vweird.f32 %v763
    %vm771 = vweird.f32 %v765
    %vm772 = vmor %vm770, %vm771
    %v773 = vsel %vm772, %v765, %v769
    %v774 = vand.u32 2147483647, %v763
    %vm775 = vcmp.eq.f32.partialorder %v774, 8.507059e+37
    %v776 = vand.u32 %v763, 2147483648
    %v777 = vor.u32 1.1754944e-38, %v776
    %v778 = vsel %vm775, %v777, %v773
    %v779 = vmul.f32 1.0, %v778
    %v780 = vrcp.pop %v764
    %v781 = vmul.f32 %v764, %v780
    %v782 = vsub.f32 1.0, %v781
    %v783 = vmul.f32 %v780, %v782
    %v784 = vadd.f32 %v780, %v783
    %vm785 = vweird.f32 %v764
    %vm786 = vweird.f32 %v780
    %vm787 = vmor %vm785, %vm786
    %v788 = vsel %vm787, %v780, %v784
    %v789 = vand.u32 2147483647, %v764
    %vm790 = vcmp.eq.f32.partialorder %v789, 8.507059e+37
    %v791 = vand.u32 %v764, 2147483648
    %v792 = vor.u32 1.1754944e-38, %v791
    %v793 = vsel %vm790, %v792, %v788
    %v794 = vmul.f32 1.0, %v793
    %v795 = vsel %vm711, %v779, 0.0
    %v796 = vsel %vm712, %v794, 0.0
    %v797 = vmul.f32 %v760, %v779
    %v798 = vmul.f32 %v762, %v794
    %v799 = vsel %vm755, %v797, 0.0
    %v800 = vsel %vm756, %v798, 0.0
    %v801 = vadd.f32 %v795, %v799
    %v802 = vadd.f32 %v796, %v800
    %v803 = vpack.c.bf16 %v802, %v801
    %v805 = vsel %vm670, %v803, 0
    %vm807 = vcmask 1041408
    %v809 = vsel %vm807, %v600, 0
    %811 = vmatpush.bf16.msra.mxu0 0
    %812 = vmatpush.bf16.msra.mxu0 0
    %813 = vmatpush.bf16.msra.mxu0 0
    %814 = vmatpush.bf16.msra.mxu0 0
    %815 = vmatpush.bf16.msra.mxu0 0
    %816 = vmatpush.bf16.msra.mxu0 0
    %817 = vmatpush.bf16.msra.mxu0 0
    %818 = vmatpush.bf16.msra.mxu0 %v809
    %819 = vmatmul.bf16.gmra.mxu0 %v805
    %v820 = vpop.f32.mrf.mxu0
    %v821 = vadd.f32 0.0, %v820
    %v822 = vpop.f32.mrf.mxu0
    %v823 = vadd.f32 0.0, %v822
    %824 = vdwg.mxu0
    %v825 = vmul.f32 %v666, %v821
    %v826 = vmul.f32 %v667, %v823
    %v827 = vpack.c.bf16 %v826, %v825
    %v828 = vld [vmem:[%s11] sm:$0xf]
    %v829 = vld [vmem:[%s11 + $0x4] sm:$0xf]
    %v830 = vld [vmem:[%s11 + $0x8] sm:$0xf]
    %v831 = vld [vmem:[%s11 + $0xc] sm:$0xf]
    %v832 = vld [vmem:[%s11 + $0x10] sm:$0xf]
    %v833 = vld [vmem:[%s11 + $0x14] sm:$0xf]
    %v834 = vld [vmem:[%s11 + $0x18] sm:$0xf]
    %v835 = vld [vmem:[%s11 + $0x1c] sm:$0xf]
    %v836 = vld [vmem:[%s11 + $0x20] sm:$0xf]
    %v837 = vld [vmem:[%s11 + $0x24] sm:$0xf]
    %v838 = vld [vmem:[%s11 + $0x28] sm:$0xf]
    %v839 = vld [vmem:[%s11 + $0x2c] sm:$0xf]
    %v840 = vld [vmem:[%s11 + $0x30] sm:$0xf]
    %v841 = vld [vmem:[%s11 + $0x34] sm:$0xf]
    %v842 = vld [vmem:[%s11 + $0x38] sm:$0xf]
    %v843 = vld [vmem:[%s11 + $0x3c] sm:$0xf]
    %v844 = vld [vmem:[%s11 + $0x40] sm:$0x3]
    %v862 = vunpack.c.l.b16 %v828
    %v863 = vunpack.c.l.b16 %v829
    %v864 = vunpack.c.l.b16 %v830
    %v865 = vunpack.c.l.b16 %v831
    %v866 = vunpack.c.l.b16 %v832
    %v867 = vunpack.c.l.b16 %v833
    %v868 = vunpack.c.l.b16 %v834
    %v869 = vunpack.c.l.b16 %v835
    %v870 = vunpack.c.l.b16 %v836
    %v871 = vunpack.c.l.b16 %v837
    %v872 = vunpack.c.l.b16 %v838
    %v873 = vunpack.c.l.b16 %v839
    %v874 = vunpack.c.l.b16 %v840
    %v875 = vunpack.c.l.b16 %v841
    %v876 = vunpack.c.l.b16 %v842
    %v877 = vunpack.c.l.b16 %v843
    %v878 = vunpack.c.l.b16 %v844
    %v879 = vpack.c.b16 %v863, %v862
    %v880 = vpack.c.b16 %v865, %v864
    %v881 = vpack.c.b16 %v867, %v866
    %v882 = vpack.c.b16 %v869, %v868
    %v883 = vpack.c.b16 %v871, %v870
    %v884 = vpack.c.b16 %v873, %v872
    %v885 = vpack.c.b16 %v875, %v874
    %v886 = vpack.c.b16 %v877, %v876
    %v887 = vpack.c.b16 %v878, %v878
    %v897 = vsel %vm807, %v887, 0
    %899 = vmatpush.bf16.msra.mxu0 %v886
    %900 = vmatpush.bf16.msra.mxu0 %v885
    %901 = vmatpush.bf16.msra.mxu0 %v884
    %902 = vmatpush.bf16.msra.mxu0 %v883
    %903 = vmatpush.bf16.msra.mxu0 %v882
    %904 = vmatpush.bf16.msra.mxu0 %v881
    %905 = vmatpush.bf16.msra.mxu0 %v880
    %906 = vmatpush.bf16.msra.mxu0 %v879
    %907 = vmatmul.bf16.gmra.mxu0 %v827
    %v908 = vpop.f32.mrf.mxu0
    %v909 = vadd.f32 0.0, %v908
    %v910 = vpop.f32.mrf.mxu0
    %v911 = vadd.f32 0.0, %v910
    %912 = vdwg.mxu0
    %913 = vmatpush.bf16.msra.mxu0 0
    %914 = vmatpush.bf16.msra.mxu0 0
    %915 = vmatpush.bf16.msra.mxu0 0
    %916 = vmatpush.bf16.msra.mxu0 0
    %917 = vmatpush.bf16.msra.mxu0 0
    %918 = vmatpush.bf16.msra.mxu0 0
    %919 = vmatpush.bf16.msra.mxu0 0
    %920 = vmatpush.bf16.msra.mxu0 %v897
    %921 = vmatmul.bf16.gmra.mxu0 %v805
    %v922 = vpop.f32.mrf.mxu0
    %v923 = vadd.f32 %v909, %v922
    %v924 = vpop.f32.mrf.mxu0
    %v925 = vadd.f32 %v911, %v924
    %926 = vdwg.mxu0
    %v927 = vpack.c.bf16 %v925, %v923
    %v928 = vld [vmem:[#allocation8] sm:$0xff]
    %v929 = vld [vmem:[#allocation8 + $0x8] sm:$0xff]
    %v930 = vld [vmem:[#allocation8 + $0x10] sm:$0xff]
    %v931 = vld [vmem:[#allocation8 + $0x18] sm:$0xff]
    %v932 = vld [vmem:[%s13] sm:$0x3]
    %v934 = vperm.slane %v932, 0
    %v935 = vperm.slane %v932, 1
    %v942 = vunpack.c.l.b16 %v928
    %v943 = vunpack.c.h.b16 %v928
    %v944 = vunpack.c.l.b16 %v929
    %v945 = vunpack.c.h.b16 %v929
    %v946 = vunpack.c.l.b16 %v930
    %v947 = vunpack.c.h.b16 %v930
    %v948 = vunpack.c.l.b16 %v931
    %v949 = vunpack.c.h.b16 %v931
    %v950 = vpack.c.b16 %v944, %v942
    %v951 = vpack.c.b16 %v945, %v943
    %v952 = vpack.c.b16 %v948, %v946
    %v953 = vpack.c.b16 %v949, %v947
    %v959 = vsel %vm148, %v927, 0
    %961 = vmatpush.bf16.msra.mxu0 0
    %962 = vmatpush.bf16.msra.mxu0 0
    %963 = vmatpush.bf16.msra.mxu0 0
    %964 = vmatpush.bf16.msra.mxu0 0
    %965 = vmatpush.bf16.msra.mxu0 0
    %966 = vmatpush.bf16.msra.mxu0 0
    %967 = vmatpush.bf16.msra.mxu0 %v952
    %968 = vmatpush.bf16.msra.mxu0 %v950
    %969 = vmatmul.bf16.gmra.mxu0 %v959
    %v970 = vpop.f32.mrf.mxu0
    %v971 = vadd.f32 %v934, %v970
    %v972 = vpop.f32.mrf.mxu0
    %v973 = vadd.f32 %v934, %v972
    %974 = vdwg.mxu0
    %975 = vmatpush.bf16.msra.mxu0 0
    %976 = vmatpush.bf16.msra.mxu0 0
    %977 = vmatpush.bf16.msra.mxu0 0
    %978 = vmatpush.bf16.msra.mxu0 0
    %979 = vmatpush.bf16.msra.mxu0 0
    %980 = vmatpush.bf16.msra.mxu0 0
    %981 = vmatpush.bf16.msra.mxu0 %v953
    %982 = vmatpush.bf16.msra.mxu0 %v951
    %983 = vmatmul.bf16.gmra.mxu0 %v959
    %v984 = vpop.f32.mrf.mxu0
    %v985 = vadd.f32 %v935, %v984
    %v986 = vpop.f32.mrf.mxu0
    %v987 = vadd.f32 %v935, %v986
    %988 = vdwg.mxu0
    %v989 = vmax.f32 %v971, 0.0
    %v990 = vmax.f32 %v973, 0.0
    %v991 = vsel %vm670, %v985, -inf
    %992 = vmax.xlane.f32.xlu0 %v991
    %v993 = vpop.xlane.xlu0 %992
    %v994 = vsel %vm670, %v987, -inf
    %995 = vmax.xlane.f32.xlu0 %v994
    %v996 = vpop.xlane.xlu0 %995
    %vm997 = vcmp.ge.f32.partialorder %v985, %v993
    %vm998 = vcmp.ge.f32.partialorder %v987, %v996
    %v999 = vsel %vm997, %v669, 4
    %v1000 = vsel %vm998, %v669, 4
    %v1001 = vsel %vm670, %v999, 2147483647
    %v1002 = vand.u32 %v1001, 65535
    %v1003 = vshra.s32 %v1001, 16
    %v1004 = vcvt.s32.f32 %v1002
    %v1005 = vcvt.s32.f32 %v1003
    %1006 = vmin.xlane.f32.xlu0 %v1005
    %v1007 = vpop.xlane.xlu0 %1006
    %vm1008 = vcmp.eq.f32.partialorder %v1005, %v1007
    %v1009 = vsel %vm1008, %v1004, inf
    %1010 = vmin.xlane.f32.xlu0 %v1009
    %v1011 = vpop.xlane.xlu0 %1010
    %v1012 = vcvt.f32.s32 %v1011
    %v1013 = vcvt.f32.s32 %v1007
    %v1014 = vshll.u32 %v1013, 16
    %v1015 = vadd.s32 %v1014, %v1012
    %v1016 = vsel %vm670, %v1000, 2147483647
    %v1017 = vand.u32 %v1016, 65535
    %v1018 = vshra.s32 %v1016, 16
    %v1019 = vcvt.s32.f32 %v1017
    %v1020 = vcvt.s32.f32 %v1018
    %1021 = vmin.xlane.f32.xlu0 %v1020
    %v1022 = vpop.xlane.xlu0 %1021
    %vm1023 = vcmp.eq.f32.partialorder %v1020, %v1022
    %v1024 = vsel %vm1023, %v1019, inf
    %1025 = vmin.xlane.f32.xlu0 %v1024
    %v1026 = vpop.xlane.xlu0 %1025
    %v1027 = vcvt.f32.s32 %v1026
    %v1028 = vcvt.f32.s32 %v1022
    %v1029 = vshll.u32 %v1028, 16
    %v1030 = vadd.s32 %v1029, %v1027
    %vm1031 = vcmp.eq.s32.totalorder %v669, %v1015
    %vm1032 = vcmp.eq.s32.totalorder %v669, %v1030
    %v1033 = vsel %vm1031, -1e+30, %v985
    %v1034 = vsel %vm1032, -1e+30, %v987
    %v1035 = vsel %vm670, %v1033, -inf
    %1036 = vmax.xlane.f32.xlu0 %v1035
    %v1037 = vpop.xlane.xlu0 %1036
    %v1038 = vsel %vm670, %v1034, -inf
    %1039 = vmax.xlane.f32.xlu0 %v1038
    %v1040 = vpop.xlane.xlu0 %1039
    %vm1041 = vcmp.ge.f32.partialorder %v1033, %v1037
    %vm1042 = vcmp.ge.f32.partialorder %v1034, %v1040
    %v1043 = vsel %vm1041, %v669, 4
    %v1044 = vsel %vm1042, %v669, 4
    %v1045 = vsel %vm670, %v1043, 2147483647
    %v1046 = vand.u32 %v1045, 65535
    %v1047 = vshra.s32 %v1045, 16
    %v1048 = vcvt.s32.f32 %v1046
    %v1049 = vcvt.s32.f32 %v1047
    %1050 = vmin.xlane.f32.xlu0 %v1049
    %v1051 = vpop.xlane.xlu0 %1050
    %vm1052 = vcmp.eq.f32.partialorder %v1049, %v1051
    %v1053 = vsel %vm1052, %v1048, inf
    %1054 = vmin.xlane.f32.xlu0 %v1053
    %v1055 = vpop.xlane.xlu0 %1054
    %v1056 = vcvt.f32.s32 %v1055
    %v1057 = vcvt.f32.s32 %v1051
    %v1058 = vshll.u32 %v1057, 16
    %v1059 = vadd.s32 %v1058, %v1056
    %v1060 = vsel %vm670, %v1044, 2147483647
    %v1061 = vand.u32 %v1060, 65535
    %v1062 = vshra.s32 %v1060, 16
    %v1063 = vcvt.s32.f32 %v1061
    %v1064 = vcvt.s32.f32 %v1062
    %1065 = vmin.xlane.f32.xlu0 %v1064
    %v1066 = vpop.xlane.xlu0 %1065
    %vm1067 = vcmp.eq.f32.partialorder %v1064, %v1066
    %v1068 = vsel %vm1067, %v1063, inf
    %1069 = vmin.xlane.f32.xlu0 %v1068
    %v1070 = vpop.xlane.xlu0 %1069
    %v1071 = vcvt.f32.s32 %v1070
    %v1072 = vcvt.f32.s32 %v1066
    %v1073 = vshll.u32 %v1072, 16
    %v1074 = vadd.s32 %v1073, %v1071
    %vm1075 = vcmp.eq.s32.totalorder %v669, %v1059
    %vm1076 = vcmp.eq.s32.totalorder %v669, %v1074
    %v1077 = vsub.f32 %v1037, %v993
    %v1078 = vsub.f32 %v1040, %v996
    %v1079 = vmul.f32 %v1077, 1.442695
    %v1080 = vpow.pop %v1079
    %v1081 = vmul.f32 %v1078, 1.442695
    %v1082 = vpow.pop %v1081
    %v1083 = vadd.f32 %v1080, 1.0
    %v1084 = vadd.f32 %v1082, 1.0
    %v1085 = vrcp.pop %v1083
    %v1086 = vmul.f32 %v1083, %v1085
    %v1087 = vsub.f32 1.0, %v1086
    %v1088 = vmul.f32 %v1085, %v1087
    %v1089 = vadd.f32 %v1085, %v1088
    %vm1090 = vweird.f32 %v1083
    %vm1091 = vweird.f32 %v1085
    %vm1092 = vmor %vm1090, %vm1091
    %v1093 = vsel %vm1092, %v1085, %v1089
    %v1094 = vand.u32 2147483647, %v1083
    %vm1095 = vcmp.eq.f32.partialorder %v1094, 8.507059e+37
    %v1096 = vand.u32 %v1083, 2147483648
    %v1097 = vor.u32 1.1754944e-38, %v1096
    %v1098 = vsel %vm1095, %v1097, %v1093
    %v1099 = vmul.f32 1.0, %v1098
    %v1100 = vrcp.pop %v1084
    %v1101 = vmul.f32 %v1084, %v1100
    %v1102 = vsub.f32 1.0, %v1101
    %v1103 = vmul.f32 %v1100, %v1102
    %v1104 = vadd.f32 %v1100, %v1103
    %vm1105 = vweird.f32 %v1084
    %vm1106 = vweird.f32 %v1100
    %vm1107 = vmor %vm1105, %vm1106
    %v1108 = vsel %vm1107, %v1100, %v1104
    %v1109 = vand.u32 2147483647, %v1084
    %vm1110 = vcmp.eq.f32.partialorder %v1109, 8.507059e+37
    %v1111 = vand.u32 %v1084, 2147483648
    %v1112 = vor.u32 1.1754944e-38, %v1111
    %v1113 = vsel %vm1110, %v1112, %v1108
    %v1114 = vmul.f32 1.0, %v1113
    %v1115 = vsel %vm1031, %v1099, 0.0
    %v1116 = vsel %vm1032, %v1114, 0.0
    %v1117 = vmul.f32 %v1080, %v1099
    %v1118 = vmul.f32 %v1082, %v1114
    %v1119 = vsel %vm1075, %v1117, 0.0
    %v1120 = vsel %vm1076, %v1118, 0.0
    %v1121 = vadd.f32 %v1115, %v1119
    %v1122 = vadd.f32 %v1116, %v1120
    %v1123 = vpack.c.bf16 %v1122, %v1121
    %v1125 = vsel %vm670, %v1123, 0
    %1127 = vmatpush.bf16.msra.mxu0 0
    %1128 = vmatpush.bf16.msra.mxu0 0
    %1129 = vmatpush.bf16.msra.mxu0 0
    %1130 = vmatpush.bf16.msra.mxu0 0
    %1131 = vmatpush.bf16.msra.mxu0 0
    %1132 = vmatpush.bf16.msra.mxu0 0
    %1133 = vmatpush.bf16.msra.mxu0 0
    %1134 = vmatpush.bf16.msra.mxu0 %v809
    %1135 = vmatmul.bf16.gmra.mxu0 %v1125
    %v1136 = vpop.f32.mrf.mxu0
    %v1137 = vadd.f32 0.0, %v1136
    %v1138 = vpop.f32.mrf.mxu0
    %v1139 = vadd.f32 0.0, %v1138
    %1140 = vdwg.mxu0
    %v1141 = vmul.f32 %v989, %v1137
    %v1142 = vmul.f32 %v990, %v1139
    %v1143 = vpack.c.bf16 %v1142, %v1141
    %v1144 = vld [vmem:[%s14] sm:$0xf]
    %v1145 = vld [vmem:[%s14 + $0x4] sm:$0xf]
    %v1146 = vld [vmem:[%s14 + $0x8] sm:$0xf]
    %v1147 = vld [vmem:[%s14 + $0xc] sm:$0xf]
    %v1148 = vld [vmem:[%s14 + $0x10] sm:$0xf]
    %v1149 = vld [vmem:[%s14 + $0x14] sm:$0xf]
    %v1150 = vld [vmem:[%s14 + $0x18] sm:$0xf]
    %v1151 = vld [vmem:[%s14 + $0x1c] sm:$0xf]
    %v1152 = vld [vmem:[%s14 + $0x20] sm:$0xf]
    %v1153 = vld [vmem:[%s14 + $0x24] sm:$0xf]
    %v1154 = vld [vmem:[%s14 + $0x28] sm:$0xf]
    %v1155 = vld [vmem:[%s14 + $0x2c] sm:$0xf]
    %v1156 = vld [vmem:[%s14 + $0x30] sm:$0xf]
    %v1157 = vld [vmem:[%s14 + $0x34] sm:$0xf]
    %v1158 = vld [vmem:[%s14 + $0x38] sm:$0xf]
    %v1159 = vld [vmem:[%s14 + $0x3c] sm:$0xf]
    %v1160 = vld [vmem:[%s14 + $0x40] sm:$0x3]
    %v1178 = vunpack.c.l.b16 %v1144
    %v1179 = vunpack.c.l.b16 %v1145
    %v1180 = vunpack.c.l.b16 %v1146
    %v1181 = vunpack.c.l.b16 %v1147
    %v1182 = vunpack.c.l.b16 %v1148
    %v1183 = vunpack.c.l.b16 %v1149
    %v1184 = vunpack.c.l.b16 %v1150
    %v1185 = vunpack.c.l.b16 %v1151
    %v1186 = vunpack.c.l.b16 %v1152
    %v1187 = vunpack.c.l.b16 %v1153
    %v1188 = vunpack.c.l.b16 %v1154
    %v1189 = vunpack.c.l.b16 %v1155
    %v1190 = vunpack.c.l.b16 %v1156
    %v1191 = vunpack.c.l.b16 %v1157
    %v1192 = vunpack.c.l.b16 %v1158
    %v1193 = vunpack.c.l.b16 %v1159
    %v1194 = vunpack.c.l.b16 %v1160
    %v1195 = vpack.c.b16 %v1179, %v1178
    %v1196 = vpack.c.b16 %v1181, %v1180
    %v1197 = vpack.c.b16 %v1183, %v1182
    %v1198 = vpack.c.b16 %v1185, %v1184
    %v1199 = vpack.c.b16 %v1187, %v1186
    %v1200 = vpack.c.b16 %v1189, %v1188
    %v1201 = vpack.c.b16 %v1191, %v1190
    %v1202 = vpack.c.b16 %v1193, %v1192
    %v1203 = vpack.c.b16 %v1194, %v1194
    %v1213 = vsel %vm807, %v1203, 0
    %1215 = vmatpush.bf16.msra.mxu0 %v1202
    %1216 = vmatpush.bf16.msra.mxu0 %v1201
    %1217 = vmatpush.bf16.msra.mxu0 %v1200
    %1218 = vmatpush.bf16.msra.mxu0 %v1199
    %1219 = vmatpush.bf16.msra.mxu0 %v1198
    %1220 = vmatpush.bf16.msra.mxu0 %v1197
    %1221 = vmatpush.bf16.msra.mxu0 %v1196
    %1222 = vmatpush.bf16.msra.mxu0 %v1195
    %1223 = vmatmul.bf16.gmra.mxu0 %v1143
    %v1224 = vpop.f32.mrf.mxu0
    %v1225 = vadd.f32 0.0, %v1224
    %v1226 = vpop.f32.mrf.mxu0
    %v1227 = vadd.f32 0.0, %v1226
    %1228 = vdwg.mxu0
    %1229 = vmatpush.bf16.msra.mxu0 0
    %1230 = vmatpush.bf16.msra.mxu0 0
    %1231 = vmatpush.bf16.msra.mxu0 0
    %1232 = vmatpush.bf16.msra.mxu0 0
    %1233 = vmatpush.bf16.msra.mxu0 0
    %1234 = vmatpush.bf16.msra.mxu0 0
    %1235 = vmatpush.bf16.msra.mxu0 0
    %1236 = vmatpush.bf16.msra.mxu0 %v1213
    %1237 = vmatmul.bf16.gmra.mxu0 %v1125
    %v1238 = vpop.f32.mrf.mxu0
    %v1239 = vadd.f32 %v1225, %v1238
    %v1240 = vpop.f32.mrf.mxu0
    %v1241 = vadd.f32 %v1227, %v1240
    %1242 = vdwg.mxu0
    %1243 = vadd.xlane.f32.xlu0 %v1239
    %v1244 = vpop.xlane.xlu0 %1243
    %1245 = vadd.xlane.f32.xlu0 %v1241
    %v1246 = vpop.xlane.xlu0 %1245
    %v1247 = vmul.f32 %v1239, %v1239
    %v1248 = vmul.f32 %v1241, %v1241
    %1249 = vadd.xlane.f32.xlu0 %v1247
    %v1250 = vpop.xlane.xlu0 %1249
    %1251 = vadd.xlane.f32.xlu0 %v1248
    %v1252 = vpop.xlane.xlu0 %1251
    %v1253 = vmul.f32 %v1244, 0.03125
    %v1254 = vmul.f32 %v1246, 0.03125
    %v1255 = vmul.f32 %v1250, 0.03125
    %v1256 = vmul.f32 %v1252, 0.03125
    %v1257 = vmul.f32 %v1253, %v1253
    %v1258 = vmul.f32 %v1254, %v1254
    %v1259 = vsub.f32 %v1255, %v1257
    %v1260 = vsub.f32 %v1256, %v1258
    %v1261 = vmax.f32 %v1259, 0.0
    %v1262 = vmax.f32 %v1260, 0.0
    %v1263 = vsub.f32 %v1239, %v1253
    %v1264 = vsub.f32 %v1241, %v1254
    %v1265 = vadd.f32 %v1261, 1e-05
    %v1266 = vadd.f32 %v1262, 1e-05
    %v1267 = vrsqrt.pop %v1265
    %v1268 = vmul.f32 %v1267, %v1265
    %v1269 = vmul.f32 %v1268, %v1267
    %v1270 = vmul.f32 0.5, %v1269
    %v1271 = vsub.f32 1.5, %v1270
    %v1272 = vmul.f32 %v1267, %v1271
    %vm1273 = vweird.f32 %v1265
    %vm1274 = vweird.f32 %v1267
    %vm1275 = vmor %vm1273, %vm1274
    %v1276 = vsel %vm1275, %v1267, %v1272
    %v1277 = vrsqrt.pop %v1266
    %v1278 = vmul.f32 %v1277, %v1266
    %v1279 = vmul.f32 %v1278, %v1277
    %v1280 = vmul.f32 0.5, %v1279
    %v1281 = vsub.f32 1.5, %v1280
    %v1282 = vmul.f32 %v1277, %v1281
    %vm1283 = vweird.f32 %v1266
    %vm1284 = vweird.f32 %v1277
    %vm1285 = vmor %vm1283, %vm1284
    %v1286 = vsel %vm1285, %v1277, %v1282
    %v1287 = vmul.f32 %v1263, %v1276
    %v1288 = vmul.f32 %v1264, %v1286
    %v1289 = vld [vmem:[%s15] sm:$0x1]
    %v1291 = vperm.slane %v1289, 0
    %v1293 = vmul.f32 %v1287, %v1291
    %v1294 = vmul.f32 %v1288, %v1291
    %v1295 = vld [vmem:[%s16] sm:$0x1]
    %v1297 = vperm.slane %v1295, 0
    %v1299 = vadd.f32 %v1293, %v1297
    %v1300 = vadd.f32 %v1294, %v1297
    %v1301 = vadd.f32 %v162, %v1299
    %v1302 = vadd.f32 %v164, %v1300
    %v1303 = vld [vmem:[%s17] sm:$0x1]
    %v1304 = vpack.c.bf16 %v1302, %v1301
    %vm1305 = vcmask 130048
    %v1307 = vsel %vm1305, %v1303, 0
    %1309 = vmatpush.bf16.msra.mxu0 0
    %1310 = vmatpush.bf16.msra.mxu0 0
    %1311 = vmatpush.bf16.msra.mxu0 0
    %1312 = vmatpush.bf16.msra.mxu0 0
    %1313 = vmatpush.bf16.msra.mxu0 0
    %1314 = vmatpush.bf16.msra.mxu0 0
    %1315 = vmatpush.bf16.msra.mxu0 0
    %1316 = vmatpush.bf16.msra.mxu0 %v1304
    %1317 = vmatmul.bf16.gmra.mxu0 %v1307
    %v1318 = vpop.f32.mrf.mxu0
    %v1319 = vadd.f32 0.0, %v1318
    %v1320 = vpop.f32.mrf.mxu0
    %1321 = vdwg.mxu0
    %v1322 = vpack.c.bf16 %v1319, %v1319
    %v1323 = vld [vmem:[%s18] sm:$0xf]
    %v1324 = vld [vmem:[%s18 + $0x4] sm:$0xf]
    %v1325 = vld [vmem:[%s18 + $0x8] sm:$0xf]
    %v1326 = vld [vmem:[%s18 + $0xc] sm:$0xf]
    %v1327 = vld [vmem:[%s18 + $0x10] sm:$0xf]
    %v1328 = vld [vmem:[%s18 + $0x14] sm:$0xf]
    %v1329 = vld [vmem:[%s18 + $0x18] sm:$0xf]
    %v1330 = vld [vmem:[%s18 + $0x1c] sm:$0xf]
    %v1331 = vld [vmem:[%s18 + $0x20] sm:$0xf]
    %v1332 = vld [vmem:[%s18 + $0x24] sm:$0xf]
    %v1333 = vld [vmem:[%s18 + $0x28] sm:$0xf]
    %v1334 = vld [vmem:[%s18 + $0x2c] sm:$0xf]
    %v1335 = vld [vmem:[%s18 + $0x30] sm:$0xf]
    %v1336 = vld [vmem:[%s18 + $0x34] sm:$0xf]
    %v1337 = vld [vmem:[%s18 + $0x38] sm:$0xf]
    %v1338 = vld [vmem:[%s18 + $0x3c] sm:$0xf]
    %v1339 = vld [vmem:[%s19] sm:$0x1]
    %v1341 = vperm.slane %v1339, 0
    %v1359 = vunpack.c.l.b16 %v1323
    %v1360 = vunpack.c.l.b16 %v1324
    %v1361 = vunpack.c.l.b16 %v1325
    %v1362 = vunpack.c.l.b16 %v1326
    %v1363 = vunpack.c.l.b16 %v1327
    %v1364 = vunpack.c.l.b16 %v1328
    %v1365 = vunpack.c.l.b16 %v1329
    %v1366 = vunpack.c.l.b16 %v1330
    %v1367 = vunpack.c.l.b16 %v1331
    %v1368 = vunpack.c.l.b16 %v1332
    %v1369 = vunpack.c.l.b16 %v1333
    %v1370 = vunpack.c.l.b16 %v1334
    %v1371 = vunpack.c.l.b16 %v1335
    %v1372 = vunpack.c.l.b16 %v1336
    %v1373 = vunpack.c.l.b16 %v1337
    %v1374 = vunpack.c.l.b16 %v1338
    %v1375 = vpack.c.b16 %v1360, %v1359
    %v1376 = vpack.c.b16 %v1362, %v1361
    %v1377 = vpack.c.b16 %v1364, %v1363
    %v1378 = vpack.c.b16 %v1366, %v1365
    %v1379 = vpack.c.b16 %v1368, %v1367
    %v1380 = vpack.c.b16 %v1370, %v1369
    %v1381 = vpack.c.b16 %v1372, %v1371
    %v1382 = vpack.c.b16 %v1374, %v1373
    %1391 = vmatpush.bf16.msra.mxu0 %v1382
    %1392 = vmatpush.bf16.msra.mxu0 %v1381
    %1393 = vmatpush.bf16.msra.mxu0 %v1380
    %1394 = vmatpush.bf16.msra.mxu0 %v1379
    %1395 = vmatpush.bf16.msra.mxu0 %v1378
    %1396 = vmatpush.bf16.msra.mxu0 %v1377
    %1397 = vmatpush.bf16.msra.mxu0 %v1376
    %1398 = vmatpush.bf16.msra.mxu0 %v1375
    %1399 = vmatmul.bf16.gmra.mxu0 %v1322
    %v1400 = vpop.f32.mrf.mxu0
    %v1401 = vadd.f32 %v1341, %v1400
    %v1402 = vpop.f32.mrf.mxu0
    %1403 = vdwg.mxu0
    %v1404 = vtanh.pop %v1401
    %v1405 = vpack.c.bf16 %v1404, %v1404
    %v1406 = vld [vmem:[%s20] sm:$0xf]
    %v1407 = vld [vmem:[%s20 + $0x4] sm:$0xf]
    %v1408 = vld [vmem:[%s20 + $0x8] sm:$0xf]
    %v1409 = vld [vmem:[%s20 + $0xc] sm:$0xf]
    %v1410 = vld [vmem:[%s20 + $0x10] sm:$0xf]
    %v1411 = vld [vmem:[%s20 + $0x14] sm:$0xf]
    %v1412 = vld [vmem:[%s20 + $0x18] sm:$0xf]
    %v1413 = vld [vmem:[%s20 + $0x1c] sm:$0xf]
    %v1414 = vld [vmem:[%s20 + $0x20] sm:$0xf]
    %v1415 = vld [vmem:[%s20 + $0x24] sm:$0xf]
    %v1416 = vld [vmem:[%s20 + $0x28] sm:$0xf]
    %v1417 = vld [vmem:[%s20 + $0x2c] sm:$0xf]
    %v1418 = vld [vmem:[%s20 + $0x30] sm:$0xf]
    %v1419 = vld [vmem:[%s20 + $0x34] sm:$0xf]
    %v1420 = vld [vmem:[%s20 + $0x38] sm:$0xf]
    %v1421 = vld [vmem:[%s20 + $0x3c] sm:$0xf]
    %v1422 = vld [vmem:[%s21] sm:$0x1]
    %v1424 = vperm.slane %v1422, 0
    %v1442 = vunpack.c.l.b16 %v1406
    %v1443 = vunpack.c.l.b16 %v1407
    %v1444 = vunpack.c.l.b16 %v1408
    %v1445 = vunpack.c.l.b16 %v1409
    %v1446 = vunpack.c.l.b16 %v1410
    %v1447 = vunpack.c.l.b16 %v1411
    %v1448 = vunpack.c.l.b16 %v1412
    %v1449 = vunpack.c.l.b16 %v1413
    %v1450 = vunpack.c.l.b16 %v1414
    %v1451 = vunpack.c.l.b16 %v1415
    %v1452 = vunpack.c.l.b16 %v1416
    %v1453 = vunpack.c.l.b16 %v1417
    %v1454 = vunpack.c.l.b16 %v1418
    %v1455 = vunpack.c.l.b16 %v1419
    %v1456 = vunpack.c.l.b16 %v1420
    %v1457 = vunpack.c.l.b16 %v1421
    %v1458 = vpack.c.b16 %v1443, %v1442
    %v1459 = vpack.c.b16 %v1445, %v1444
    %v1460 = vpack.c.b16 %v1447, %v1446
    %v1461 = vpack.c.b16 %v1449, %v1448
    %v1462 = vpack.c.b16 %v1451, %v1450
    %v1463 = vpack.c.b16 %v1453, %v1452
    %v1464 = vpack.c.b16 %v1455, %v1454
    %v1465 = vpack.c.b16 %v1457, %v1456
    %1474 = vmatpush.bf16.msra.mxu0 %v1465
    %1475 = vmatpush.bf16.msra.mxu0 %v1464
    %1476 = vmatpush.bf16.msra.mxu0 %v1463
    %1477 = vmatpush.bf16.msra.mxu0 %v1462
    %1478 = vmatpush.bf16.msra.mxu0 %v1461
    %1479 = vmatpush.bf16.msra.mxu0 %v1460
    %1480 = vmatpush.bf16.msra.mxu0 %v1459
    %1481 = vmatpush.bf16.msra.mxu0 %v1458
    %1482 = vmatmul.bf16.gmra.mxu0 %v1405
    %v1483 = vpop.f32.mrf.mxu0
    %v1484 = vadd.f32 %v1424, %v1483
    %v1485 = vpop.f32.mrf.mxu0
    %1486 = vdwg.mxu0
    %1487 = vst [vmem:[#allocation9] sm:$0x3] %v1484
    // Predicated region
    $region102: #{mora_for_sequence_classification.1} parent=1 // pred_check
      _
    $region103: #{mora_for_sequence_classification.1} parent=1 // pred_check_branch
      %1489 = sbr.rel (0) target = $region105
    $region104: #{mora_for_sequence_classification.1} parent=1 // pred_region
      %1491 = vsyncadd [#allocation5], 0
      %s1493 = sshll.u32 [#allocation9], 4
      %s1494 = int_to_ptr.vmem [resolvable:$true] %s1493
      %s1495 = sshll.u32 %s22, 4
      %s1496 = int_to_ptr.hbm [resolvable:$true] %s1495
      %1498 = dma.vmem_to_hbm [thread:$0]  %s1494, 32, %s1496, [#allocation5]
    $region105: #{mora_for_sequence_classification.1} parent=1 // pred_fallthru
      _
    // Predicated region
    $region106: #{mora_for_sequence_classification.1} parent=1 // pred_check
      _
    $region107: #{mora_for_sequence_classification.1} parent=1 // pred_check_branch
      %1500 = sbr.rel (0) target = $region109
    $region108: #{mora_for_sequence_classification.1} parent=1 // pred_region
      %1502 = dma.done [#allocation5], 32
    $region109: #{mora_for_sequence_classification.1} parent=1 // pred_fallthru
      _
    %1503 = vsyncpa [#allocation4], 1
    %1504 = vsyncpa [#allocation7], 1
    %1505 = vsyncpa [#allocation5], 1

</llo_original>
